<compile_context>
chip_gen: v7x
topology: tpu7x:2x2x1
jax: 0.10.0
libtpu: 0.0.40
codegen_flags: <defaults>
</compile_context>

<pallas_src>
import jax
import jax.numpy as jnp
from jax.experimental import pallas as pl
from jax.experimental.pallas import tpu as pltpu

H_HIDDEN = 768    # transformer hidden size (fixed by nn.Linear(768, ...))
A_HIDDEN = 386    # attention MLP hidden size (as declared in the PyTorch module)
A_PAD = 512       # 386 padded up to the next multiple of 128 (zero-padded, exact math)
N_CLASSES = 2     # fc1 output size


def _pooled_classifier_kernel(x_ref, w1_ref, b1_ref, w2_ref, b2_ref,
                              wf_ref, bf_ref, out_ref):
    # x: [TB, L, H] bf16 tile of last_hidden_states
    xb = x_ref[...]
    TB, L, H = xb.shape

    # ---- attention MLP layer 1 on the MXU: bf16 inputs, f32 accumulate ----
    x2d = xb.reshape(TB * L, H)                                         # [TB*L, H] bf16
    h = jnp.dot(x2d, w1_ref[...], preferred_element_type=jnp.float32)   # [TB*L, A_PAD] f32
    h = jnp.tanh(h + b1_ref[...])                                       # bias + tanh (EUP)

    # ---- attention MLP layer 2 (output width 1): VPU multiply + lane reduce ----
    # Zero-padded columns of w2 contribute nothing; keeps the MXU free and the
    # result lane-dense as [TB, L] (L on the lane axis) for the softmax.
    h3 = h.reshape(TB, L, A_PAD)
    s = jnp.sum(h3 * w2_ref[...], axis=-1) + b2_ref[...]                # [TB, L] f32

    # ---- softmax over the sequence axis (lane-dense, numerically stable) ----
    s = s - jnp.max(s, axis=-1, keepdims=True)
    e = jnp.exp(s)
    attn = e * pl.reciprocal(jnp.sum(e, axis=-1, keepdims=True), approx=True)  # [TB, L]

    # ---- weighted sum over sequence -> sentence embedding [TB, H] (f32) ----
    xf = xb.astype(jnp.float32)
    sent = jnp.sum(xf * attn[:, :, None], axis=1)                       # [TB, H]

    # dropout2 (p=0.3) is identity in eval mode.

    # ---- fc1: Linear(768, 2) ----
    out = jnp.dot(sent, wf_ref[...], preferred_element_type=jnp.float32) + bf_ref[...]
    out_ref[...] = out.astype(out_ref.dtype)


def custom_model_forward(last_hidden_states, params):
    """last_hidden_states: [B, L, 768] f32. params: dict of pre-transposed weights."""
    B, L, H = last_hidden_states.shape
    assert H == H_HIDDEN

    # Batch tile: a multiple of 8 sublanes when possible, else the whole (small) batch.
    # For realistic workloads choose B % 8 == 0 and size TB so that
    # 2 (double-buffer) * TB*L*768*2B stays comfortably under the scoped VMEM limit
    # (v7x has only 64 MiB physical VMEM).
    TB = 8 if B % 8 == 0 else B
    grid = (B // TB,)

    # ---- layout / dtype prep: done once in XLA, outside the kernel ----
    x_bf16 = last_hidden_states.astype(jnp.bfloat16)

    w1 = jnp.zeros((H_HIDDEN, A_PAD), jnp.bfloat16).at[:, :A_HIDDEN].set(
        params["w1"].astype(jnp.bfloat16))                       # [768, 512] bf16
    b1 = jnp.zeros((1, A_PAD), jnp.float32).at[:, :A_HIDDEN].set(params["b1"])
    w2 = jnp.zeros((1, A_PAD), jnp.float32).at[:, :A_HIDDEN].set(params["w2"][:, 0])
    b2 = params["b2"]                                            # [1, 1] f32
    wf = params["wf"]                                            # [768, 2] f32
    bf = params["bf"]                                            # [1, 2] f32

    def resident(shape):
        nd = len(shape)
        return pl.BlockSpec(shape, lambda b, nd=nd: (0,) * nd)   # same block every step

    # ---- cost estimate (lets XLA schedule this next to the backbone) ----
    flops = int(2 * B * L * H_HIDDEN * A_PAD        # attention layer 1 (MXU)
                + 2 * B * L * A_PAD                 # attention layer 2 (VPU reduce)
                + 6 * B * L                         # softmax adds/muls
                + 2 * B * L * H_HIDDEN              # weighted sum
                + 2 * B * H_HIDDEN * N_CLASSES)     # fc1
    transcendentals = int(B * L * (A_PAD + 1))      # tanh + exp
    bytes_accessed = int(x_bf16.size * 2
                         + w1.size * 2
                         + (b1.size + w2.size + b2.size + wf.size + bf.size) * 4
                         + B * N_CLASSES * 4)

    # ---- explicit VMEM budget: double-buffered x tile + resident weights + headroom ----
    x_tile_bytes = TB * L * H_HIDDEN * 2
    weight_bytes = w1.size * 2 + (b1.size + w2.size + b2.size + wf.size + bf.size) * 4
    vmem_limit = int(min(48 * 2**20,                            # stay under v7x's 64 MiB
                         max(16 * 2**20,
                             4 * x_tile_bytes + 2 * weight_bytes + (4 << 20))))

    return pl.pallas_call(
        _pooled_classifier_kernel,
        out_shape=jax.ShapeDtypeStruct((B, N_CLASSES), jnp.float32),
        grid=grid,
        in_specs=[
            pl.BlockSpec((TB, L, H_HIDDEN), lambda b: (b, 0, 0)),   # x: tiled over batch
            resident((H_HIDDEN, A_PAD)),                            # w1
            resident((1, A_PAD)),                                   # b1
            resident((1, A_PAD)),                                   # w2 (row vector)
            resident((1, 1)),                                       # b2
            resident((H_HIDDEN, N_CLASSES)),                        # wf
            resident((1, N_CLASSES)),                               # bf
        ],
        out_specs=pl.BlockSpec((TB, N_CLASSES), lambda b: (b, 0)),
        compiler_params=pltpu.CompilerParams(
            dimension_semantics=("parallel",),                      # 2 TCs on v7x
            vmem_limit_bytes=vmem_limit),
        cost_estimate=pl.CostEstimate(flops=flops,
                                      transcendentals=transcendentals,
                                      bytes_accessed=bytes_accessed),
    )(x_bf16, w1, b1, w2, b2, wf, bf)


def init_params(key):
    """Deterministic synthetic parameters with the shapes implied by __init__."""
    k1, k2, k3, k4, k5, k6 = jax.random.split(key, 6)
    scale = 0.02
    return {
        # attention[0]: Linear(768, 386) -> stored as [in, out]
        "w1": scale * jax.random.normal(k1, (H_HIDDEN, A_HIDDEN), jnp.float32),
        "b1": scale * jax.random.normal(k2, (1, A_HIDDEN), jnp.float32),
        # attention[2]: Linear(386, 1)
        "w2": scale * jax.random.normal(k3, (A_HIDDEN, 1), jnp.float32),
        "b2": scale * jax.random.normal(k4, (1, 1), jnp.float32),
        # fc1: Linear(768, 2)
        "wf": scale * jax.random.normal(k5, (H_HIDDEN, N_CLASSES), jnp.float32),
        "bf": scale * jax.random.normal(k6, (1, N_CLASSES), jnp.float32),
    }


def reference_forward(x, p):
    """Pure-JAX f32 reference of the same math (for a correctness check)."""
    h = jnp.tanh(jnp.einsum("bld,da->bla", x, p["w1"]) + p["b1"][None])
    s = jnp.einsum("bla,ao->blo", h, p["w2"]) + p["b2"][None]
    w = jax.nn.softmax(s, axis=1)
    sent = jnp.sum(x * w, axis=1)
    return sent @ p["wf"] + p["bf"]


if __name__ == "__main__":
    # TODO(synk): the AutoModel transformer backbone is not implemented; the kernel
    # consumes its last_hidden_states output directly.
    key = jax.random.PRNGKey(0)
    k_x, k_p = jax.random.split(key)

    B, L = 2, 8  # small batch / sequence length (cfg.max_len)
    x = jax.random.normal(k_x, (B, L, H_HIDDEN), jnp.float32)
    params = init_params(k_p)

    out = jax.block_until_ready(custom_model_forward(x, params))
    ref = reference_forward(x, params)

    assert out.shape == (B, N_CLASSES)
    # bf16 inputs to the big matmul + approx reciprocal -> loosened tolerance vs f32 ref
    assert jnp.allclose(out, ref, atol=1e-2, rtol=1e-2), (out, ref)

    print("KERNEL_OK")
</pallas_src>

<mosaic_0001>
module attributes {stable_mosaic.version = 11 : i64} {
  func.func @_pooled_classifier_kernel(%arg0: i32, %arg1: memref<2x8x768xbf16, #tpu.memory_space<vmem>>, %arg2: memref<768x512xbf16, #tpu.memory_space<vmem>>, %arg3: memref<1x512xf32, #tpu.memory_space<vmem>>, %arg4: memref<1x512xf32, #tpu.memory_space<vmem>>, %arg5: memref<1x1xf32, #tpu.memory_space<vmem>>, %arg6: memref<768x2xf32, #tpu.memory_space<vmem>>, %arg7: memref<1x2xf32, #tpu.memory_space<vmem>>, %arg8: memref<2x2xf32, #tpu.memory_space<vmem>>) attributes {dimension_semantics = [#tpu.dimension_semantics<parallel>], iteration_bounds = array<i64: 1>, scalar_prefetch = 0 : i64, scratch_operands = 0 : i64, tpu.core_type = #tpu.core_type<tc>, window_params = [{transform_indices = @transform_0, window_bounds = array<i64: 2, 8, 768>}, {pipeline_mode = #tpu.pipeline_mode<synchronous>, transform_indices = @transform_1, window_bounds = array<i64: 768, 512>}, {pipeline_mode = #tpu.pipeline_mode<synchronous>, transform_indices = @transform_2, window_bounds = array<i64: 1, 512>}, {pipeline_mode = #tpu.pipeline_mode<synchronous>, transform_indices = @transform_3, window_bounds = array<i64: 1, 512>}, {pipeline_mode = #tpu.pipeline_mode<synchronous>, transform_indices = @transform_4, window_bounds = array<i64: 1, 1>}, {pipeline_mode = #tpu.pipeline_mode<synchronous>, transform_indices = @transform_5, window_bounds = array<i64: 768, 2>}, {pipeline_mode = #tpu.pipeline_mode<synchronous>, transform_indices = @transform_6, window_bounds = array<i64: 1, 2>}, {transform_indices = @transform_7, window_bounds = array<i64: 2, 2>}]} {
    %c0 = arith.constant 0 : index
    %c0_0 = arith.constant 0 : index
    %c0_1 = arith.constant 0 : index
    %0 = vector.load %arg1[%c0, %c0_0, %c0_1] : memref<2x8x768xbf16, #tpu.memory_space<vmem>>, vector<2x8x768xbf16>
    %1 = vector.shape_cast %0 : vector<2x8x768xbf16> to vector<16x768xbf16>
    %c0_2 = arith.constant 0 : index
    %c0_3 = arith.constant 0 : index
    %2 = vector.load %arg2[%c0_2, %c0_3] : memref<768x512xbf16, #tpu.memory_space<vmem>>, vector<768x512xbf16>
    %cst = arith.constant dense<0.000000e+00> : vector<16x512xf32>
    %3 = tpu.matmul %1, %2, %cst {dimension_numbers = #tpu.dot_dimension_numbers<[1], [0], [0], [1], [0, 0, 1, 1], [], []>} : vector<16x768xbf16>, vector<768x512xbf16>, vector<16x512xf32> -> vector<16x512xf32>
    %c0_4 = arith.constant 0 : index
    %c0_5 = arith.constant 0 : index
    %4 = vector.load %arg3[%c0_4, %c0_5] : memref<1x512xf32, #tpu.memory_space<vmem>>, vector<1x512xf32>
    %5 = vector.broadcast %4 : vector<1x512xf32> to vector<16x512xf32>
    %6 = arith.addf %3, %5 : vector<16x512xf32>
    %7 = math.tanh %6 : vector<16x512xf32>
    %8 = vector.shape_cast %7 : vector<16x512xf32> to vector<2x8x512xf32>
    %c0_6 = arith.constant 0 : index
    %c0_7 = arith.constant 0 : index
    %9 = vector.load %arg4[%c0_6, %c0_7] : memref<1x512xf32, #tpu.memory_space<vmem>>, vector<1x512xf32>
    %10 = vector.shape_cast %9 : vector<1x512xf32> to vector<1x1x512xf32>
    %11 = vector.broadcast %10 : vector<1x1x512xf32> to vector<2x8x512xf32>
    %12 = arith.mulf %8, %11 : vector<2x8x512xf32>
    %cst_8 = arith.constant dense<0.000000e+00> : vector<2x8xf32>
    %13 = vector.multi_reduction <add>, %12, %cst_8 [2] : vector<2x8x512xf32> to vector<2x8xf32>
    %c0_9 = arith.constant 0 : index
    %c0_10 = arith.constant 0 : index
    %14 = vector.load %arg5[%c0_9, %c0_10] : memref<1x1xf32, #tpu.memory_space<vmem>>, vector<1x1xf32>
    %15 = vector.broadcast %14 : vector<1x1xf32> to vector<2x8xf32>
    %16 = arith.addf %13, %15 : vector<2x8xf32>
    %cst_11 = arith.constant dense<0xFF800000> : vector<2xf32>
    %17 = vector.multi_reduction <maximumf>, %16, %cst_11 [1] : vector<2x8xf32> to vector<2xf32>
    %18 = vector.shape_cast %17 : vector<2xf32> to vector<2x1xf32>
    %19 = vector.broadcast %18 : vector<2x1xf32> to vector<2x8xf32>
    %20 = arith.subf %16, %19 : vector<2x8xf32>
    %21 = math.exp %20 : vector<2x8xf32>
    %cst_12 = arith.constant dense<0.000000e+00> : vector<2xf32>
    %22 = vector.multi_reduction <add>, %21, %cst_12 [1] : vector<2x8xf32> to vector<2xf32>
    %23 = vector.shape_cast %22 : vector<2xf32> to vector<2x1xf32>
    %24 = tpu.reciprocal %23 {approx = true} : vector<2x1xf32> -> vector<2x1xf32>
    %25 = vector.broadcast %24 : vector<2x1xf32> to vector<2x8xf32>
    %26 = arith.mulf %21, %25 : vector<2x8xf32>
    %27 = arith.extf %0 : vector<2x8x768xbf16> to vector<2x8x768xf32>
    %28 = vector.shape_cast %26 : vector<2x8xf32> to vector<2x8x1xf32>
    %29 = vector.broadcast %28 : vector<2x8x1xf32> to vector<2x8x768xf32>
    %30 = arith.mulf %27, %29 : vector<2x8x768xf32>
    %cst_13 = arith.constant dense<0.000000e+00> : vector<2x768xf32>
    %31 = vector.multi_reduction <add>, %30, %cst_13 [1] : vector<2x8x768xf32> to vector<2x768xf32>
    %c0_14 = arith.constant 0 : index
    %c0_15 = arith.constant 0 : index
    %32 = vector.load %arg6[%c0_14, %c0_15] : memref<768x2xf32, #tpu.memory_space<vmem>>, vector<768x2xf32>
    %cst_16 = arith.constant dense<0.000000e+00> : vector<2x2xf32>
    %33 = tpu.matmul %31, %32, %cst_16 {dimension_numbers = #tpu.dot_dimension_numbers<[1], [0], [0], [1], [0, 0, 1, 1], [], []>} : vector<2x768xf32>, vector<768x2xf32>, vector<2x2xf32> -> vector<2x2xf32>
    %c0_17 = arith.constant 0 : index
    %c0_18 = arith.constant 0 : index
    %34 = vector.load %arg7[%c0_17, %c0_18] : memref<1x2xf32, #tpu.memory_space<vmem>>, vector<1x2xf32>
    %35 = vector.broadcast %34 : vector<1x2xf32> to vector<2x2xf32>
    %36 = arith.addf %33, %35 : vector<2x2xf32>
    %c0_19 = arith.constant 0 : index
    %c0_20 = arith.constant 0 : index
    %37 = vector.load %arg8[%c0_19, %c0_20] : memref<2x2xf32, #tpu.memory_space<vmem>>, vector<2x2xf32>
    tpu.vector_store %arg8[%c0_19, %c0_20], %36 {strides = array<i32>} : memref<2x2xf32, #tpu.memory_space<vmem>>, vector<2x2xf32>,
    return
  }
  func.func @transform_0(%arg0: i32) -> (i32, i32, i32) {
    %c0_i32 = arith.constant 0 : i32
    %c0_i32_0 = arith.constant 0 : i32
    %c0_i32_1 = arith.constant 0 : i32
    return %arg0, %c0_i32, %c0_i32_0 : i32, i32, i32
  }
  func.func @transform_1(%arg0: i32) -> (i32, i32) {
    %c0_i32 = arith.constant 0 : i32
    %c0_i32_0 = arith.constant 0 : i32
    %c0_i32_1 = arith.constant 0 : i32
    return %c0_i32, %c0_i32_0 : i32, i32
  }
  func.func @transform_2(%arg0: i32) -> (i32, i32) {
    %c0_i32 = arith.constant 0 : i32
    %c0_i32_0 = arith.constant 0 : i32
    %c0_i32_1 = arith.constant 0 : i32
    return %c0_i32, %c0_i32_0 : i32, i32
  }
  func.func @transform_3(%arg0: i32) -> (i32, i32) {
    %c0_i32 = arith.constant 0 : i32
    %c0_i32_0 = arith.constant 0 : i32
    %c0_i32_1 = arith.constant 0 : i32
    return %c0_i32, %c0_i32_0 : i32, i32
  }
  func.func @transform_4(%arg0: i32) -> (i32, i32) {
    %c0_i32 = arith.constant 0 : i32
    %c0_i32_0 = arith.constant 0 : i32
    %c0_i32_1 = arith.constant 0 : i32
    return %c0_i32, %c0_i32_0 : i32, i32
  }
  func.func @transform_5(%arg0: i32) -> (i32, i32) {
    %c0_i32 = arith.constant 0 : i32
    %c0_i32_0 = arith.constant 0 : i32
    %c0_i32_1 = arith.constant 0 : i32
    return %c0_i32, %c0_i32_0 : i32, i32
  }
  func.func @transform_6(%arg0: i32) -> (i32, i32) {
    %c0_i32 = arith.constant 0 : i32
    %c0_i32_0 = arith.constant 0 : i32
    %c0_i32_1 = arith.constant 0 : i32
    return %c0_i32, %c0_i32_0 : i32, i32
  }
  func.func @transform_7(%arg0: i32) -> (i32, i32) {
    %c0_i32 = arith.constant 0 : i32
    %c0_i32_0 = arith.constant 0 : i32
    return %arg0, %c0_i32 : i32, i32
  }
}

</mosaic_0001>

<llo_original>
// kernel: tpu_custom_call.1
$region0: #{tpu_custom_call.1}
  #allocation0 [shape = 'u32[]', space=smem, size = 0x4, offset = 0x4, fixed_abs, tag = 'smem constant byte address 0x4 - core index']
  #allocation1 [shape = 'u32[144,128]{1,0:T(1,128)}', space=vmem, size = 0x12000, scoped, tag = 'internal scratch']
  #allocation2 [shape = 'f32[1,1]{1,0:T(1,128)S(1)}', space=vmem, size = 0x200, scoped, tag = 'scoped memory for tpu_custom_call.1']
  %s0 = inlined_call_operand.vmem [shape: bf16[2,8,768], index: 0, kind: input, shape index: {}]
  %s1 = inlined_call_operand.hbm [shape: bf16[768,512], index: 1, kind: input, shape index: {}]
  %s2 = inlined_call_operand.vmem [shape: f32[1,512], index: 2, kind: input, shape index: {}]
  %s3 = inlined_call_operand.vmem [shape: f32[1,512], index: 3, kind: input, shape index: {}]
  %s4 = inlined_call_operand.<no memory space> [shape: f32[1,1], index: 4, kind: input, shape index: {}]
  %s5 = inlined_call_operand.vmem [shape: f32[768,2], index: 5, kind: input, shape index: {}]
  %s6 = inlined_call_operand.vmem [shape: f32[1,2], index: 6, kind: input, shape index: {}]
  %s7 = inlined_call_operand.hbm [shape: f32[2,2], index: 7, kind: output, shape index: {}]
  %s8 = sld [smem:[#allocation0]]
  $region42: #{tpu_custom_call.1} parent=0
    _
  %s10 = ssub.s32 1, %s8
  %s11 = scalar_select 0, %s10, %s8
  %v12 = vstv %s4
  %13 = vst [vmem:[#allocation2] sm:$0x1] %v12
  $region1: #{tpu_custom_call.1} parent=0
    #allocation3 [shape = 'u8[786432]{0}', space=vmem, size = 0xc0000, scoped, tag = 'input window, operand 1, single buffered']
    #allocation4 [shape = 's32[1]{0}', space=sflag, size = 0x4, scoped, tag = 'scoped memory for tpu_custom_call.1']
    #allocation5 [shape = 's32[1]{0}', space=sflag, size = 0x4, scoped, tag = 'scoped memory for tpu_custom_call.1']
    #allocation6 [shape = 'u8[1024]{0}', space=vmem, size = 0x400, scoped, tag = 'output window, operand 0, single buffered']
    %14 = vsyncpa [#allocation4], 0
    %15 = vsyncpa [#allocation5], 0
    // Predicated region
    $region2: #{tpu_custom_call.1} parent=1 // pred_check
      _
    $region3: #{tpu_custom_call.1} parent=1 // pred_check_branch
      %17 = sbr.rel (0) target = $region5
    $region4: #{tpu_custom_call.1} parent=1 // pred_region
      _
    $region5: #{tpu_custom_call.1} parent=1 // pred_fallthru
      _
    // Predicated region
    $region6: #{tpu_custom_call.1} parent=1 // pred_check
      _
    $region7: #{tpu_custom_call.1} parent=1 // pred_check_branch
      %19 = sbr.rel (0) target = $region9
    $region8: #{tpu_custom_call.1} parent=1 // pred_region
      %s21 = ssub.s32 24576, 24576
      %22 = vsyncadd [#allocation4], %s21
      %s23 = sshll.u32 [#allocation3], 4
      %s24 = int_to_ptr.vmem [resolvable:$true] %s23
      %29 = dma.hbm_to_vmem [thread:$0]  %s1, 24576, %s24, [#allocation4], 256, 256, 16
    $region9: #{tpu_custom_call.1} parent=1 // pred_fallthru
      _
    // Predicated region
    $region10: #{tpu_custom_call.1} parent=1 // pred_check
      _
    $region11: #{tpu_custom_call.1} parent=1 // pred_check_branch
      %31 = sbr.rel (0) target = $region13
    $region12: #{tpu_custom_call.1} parent=1 // pred_region
      _
    $region13: #{tpu_custom_call.1} parent=1 // pred_fallthru
      _
    // Predicated region
    $region14: #{tpu_custom_call.1} parent=1 // pred_check
      _
    $region15: #{tpu_custom_call.1} parent=1 // pred_check_branch
      %33 = sbr.rel (0) target = $region17
    $region16: #{tpu_custom_call.1} parent=1 // pred_region
      _
    $region17: #{tpu_custom_call.1} parent=1 // pred_fallthru
      _
    // Predicated region
    $region18: #{tpu_custom_call.1} parent=1 // pred_check
      _
    $region19: #{tpu_custom_call.1} parent=1 // pred_check_branch
      %35 = sbr.rel (0) target = $region21
    $region20: #{tpu_custom_call.1} parent=1 // pred_region
      _
    $region21: #{tpu_custom_call.1} parent=1 // pred_fallthru
      _
    // Predicated region
    $region22: #{tpu_custom_call.1} parent=1 // pred_check
      _
    $region23: #{tpu_custom_call.1} parent=1 // pred_check_branch
      %37 = sbr.rel (0) target = $region25
    $region24: #{tpu_custom_call.1} parent=1 // pred_region
      _
    $region25: #{tpu_custom_call.1} parent=1 // pred_fallthru
      _
    // Predicated region
    $region26: #{tpu_custom_call.1} parent=1 // pred_check
      _
    $region27: #{tpu_custom_call.1} parent=1 // pred_check_branch
      %39 = sbr.rel (0) target = $region29
    $region28: #{tpu_custom_call.1} parent=1 // pred_region
      _
    $region29: #{tpu_custom_call.1} parent=1 // pred_fallthru
      _
    // Predicated region
    $region30: #{tpu_custom_call.1} parent=1 // pred_check
      _
    $region31: #{tpu_custom_call.1} parent=1 // pred_check_branch
      %41 = sbr.rel (0) target = $region33
    $region32: #{tpu_custom_call.1} parent=1 // pred_region
      %42 = dma.done [#allocation4], 24576
    $region33: #{tpu_custom_call.1} parent=1 // pred_fallthru
      _
    %v43 = vld [vmem:[%s0] sm:$0xff]
    %v44 = vld [vmem:[%s0 + $0x8] sm:$0xff]
    %v45 = vld [vmem:[%s0 + $0x10] sm:$0xff]
    %v46 = vld [vmem:[%s0 + $0x18] sm:$0xff]
    %v47 = vld [vmem:[%s0 + $0x20] sm:$0xff]
    %v48 = vld [vmem:[%s0 + $0x28] sm:$0xff]
    %v49 = vld [vmem:[#allocation3] sm:$0xff]
    %v50 = vld [vmem:[#allocation3 + $0x8] sm:$0xff]
    %v51 = vld [vmem:[#allocation3 + $0x10] sm:$0xff]
    %v52 = vld [vmem:[#allocation3 + $0x18] sm:$0xff]
    %v53 = vld [vmem:[#allocation3 + $0x20] sm:$0xff]
    %v54 = vld [vmem:[#allocation3 + $0x28] sm:$0xff]
    %v55 = vld [vmem:[#allocation3 + $0x30] sm:$0xff]
    %v56 = vld [vmem:[#allocation3 + $0x38] sm:$0xff]
    %v57 = vld [vmem:[#allocation3 + $0x40] sm:$0xff]
    %v58 = vld [vmem:[#allocation3 + $0x48] sm:$0xff]
    %v59 = vld [vmem:[#allocation3 + $0x50] sm:$0xff]
    %v60 = vld [vmem:[#allocation3 + $0x58] sm:$0xff]
    %v61 = vld [vmem:[#allocation3 + $0x60] sm:$0xff]
    %v62 = vld [vmem:[#allocation3 + $0x68] sm:$0xff]
    %v63 = vld [vmem:[#allocation3 + $0x70] sm:$0xff]
    %v64 = vld [vmem:[#allocation3 + $0x78] sm:$0xff]
    %v65 = vld [vmem:[#allocation3 + $0x80] sm:$0xff]
    %v66 = vld [vmem:[#allocation3 + $0x88] sm:$0xff]
    %v67 = vld [vmem:[#allocation3 + $0x90] sm:$0xff]
    %v68 = vld [vmem:[#allocation3 + $0x98] sm:$0xff]
    %v69 = vld [vmem:[#allocation3 + $0xa0] sm:$0xff]
    %v70 = vld [vmem:[#allocation3 + $0xa8] sm:$0xff]
    %v71 = vld [vmem:[#allocation3 + $0xb0] sm:$0xff]
    %v72 = vld [vmem:[#allocation3 + $0xb8] sm:$0xff]
    %v73 = vld [vmem:[#allocation3 + $0xc0] sm:$0xff]
    %v74 = vld [vmem:[#allocation3 + $0xc8] sm:$0xff]
    %v75 = vld [vmem:[#allocation3 + $0xd0] sm:$0xff]
    %v76 = vld [vmem:[#allocation3 + $0xd8] sm:$0xff]
    %v77 = vld [vmem:[#allocation3 + $0xe0] sm:$0xff]
    %v78 = vld [vmem:[#allocation3 + $0xe8] sm:$0xff]
    %v79 = vld [vmem:[#allocation3 + $0xf0] sm:$0xff]
    %v80 = vld [vmem:[#allocation3 + $0xf8] sm:$0xff]
    %v81 = vld [vmem:[#allocation3 + $0x100] sm:$0xff]
    %v82 = vld [vmem:[#allocation3 + $0x108] sm:$0xff]
    %v83 = vld [vmem:[#allocation3 + $0x110] sm:$0xff]
    %v84 = vld [vmem:[#allocation3 + $0x118] sm:$0xff]
    %v85 = vld [vmem:[#allocation3 + $0x120] sm:$0xff]
    %v86 = vld [vmem:[#allocation3 + $0x128] sm:$0xff]
    %v87 = vld [vmem:[#allocation3 + $0x130] sm:$0xff]
    %v88 = vld [vmem:[#allocation3 + $0x138] sm:$0xff]
    %v89 = vld [vmem:[#allocation3 + $0x140] sm:$0xff]
    %v90 = vld [vmem:[#allocation3 + $0x148] sm:$0xff]
    %v91 = vld [vmem:[#allocation3 + $0x150] sm:$0xff]
    %v92 = vld [vmem:[#allocation3 + $0x158] sm:$0xff]
    %v93 = vld [vmem:[#allocation3 + $0x160] sm:$0xff]
    %v94 = vld [vmem:[#allocation3 + $0x168] sm:$0xff]
    %v95 = vld [vmem:[#allocation3 + $0x170] sm:$0xff]
    %v96 = vld [vmem:[#allocation3 + $0x178] sm:$0xff]
    %v97 = vld [vmem:[#allocation3 + $0x180] sm:$0xff]
    %v98 = vld [vmem:[#allocation3 + $0x188] sm:$0xff]
    %v99 = vld [vmem:[#allocation3 + $0x190] sm:$0xff]
    %v100 = vld [vmem:[#allocation3 + $0x198] sm:$0xff]
    %v101 = vld [vmem:[#allocation3 + $0x1a0] sm:$0xff]
    %v102 = vld [vmem:[#allocation3 + $0x1a8] sm:$0xff]
    %v103 = vld [vmem:[#allocation3 + $0x1b0] sm:$0xff]
    %v104 = vld [vmem:[#allocation3 + $0x1b8] sm:$0xff]
    %v105 = vld [vmem:[#allocation3 + $0x1c0] sm:$0xff]
    %v106 = vld [vmem:[#allocation3 + $0x1c8] sm:$0xff]
    %v107 = vld [vmem:[#allocation3 + $0x1d0] sm:$0xff]
    %v108 = vld [vmem:[#allocation3 + $0x1d8] sm:$0xff]
    %v109 = vld [vmem:[#allocation3 + $0x1e0] sm:$0xff]
    %v110 = vld [vmem:[#allocation3 + $0x1e8] sm:$0xff]
    %v111 = vld [vmem:[#allocation3 + $0x1f0] sm:$0xff]
    %v112 = vld [vmem:[#allocation3 + $0x1f8] sm:$0xff]
    %v113 = vld [vmem:[#allocation3 + $0x200] sm:$0xff]
    %v114 = vld [vmem:[#allocation3 + $0x208] sm:$0xff]
    %v115 = vld [vmem:[#allocation3 + $0x210] sm:$0xff]
    %v116 = vld [vmem:[#allocation3 + $0x218] sm:$0xff]
    %v117 = vld [vmem:[#allocation3 + $0x220] sm:$0xff]
    %v118 = vld [vmem:[#allocation3 + $0x228] sm:$0xff]
    %v119 = vld [vmem:[#allocation3 + $0x230] sm:$0xff]
    %v120 = vld [vmem:[#allocation3 + $0x238] sm:$0xff]
    %v121 = vld [vmem:[#allocation3 + $0x240] sm:$0xff]
    %v122 = vld [vmem:[#allocation3 + $0x248] sm:$0xff]
    %v123 = vld [vmem:[#allocation3 + $0x250] sm:$0xff]
    %v124 = vld [vmem:[#allocation3 + $0x258] sm:$0xff]
    %v125 = vld [vmem:[#allocation3 + $0x260] sm:$0xff]
    %v126 = vld [vmem:[#allocation3 + $0x268] sm:$0xff]
    %v127 = vld [vmem:[#allocation3 + $0x270] sm:$0xff]
    %v128 = vld [vmem:[#allocation3 + $0x278] sm:$0xff]
    %v129 = vld [vmem:[#allocation3 + $0x280] sm:$0xff]
    %v130 = vld [vmem:[#allocation3 + $0x288] sm:$0xff]
    %v131 = vld [vmem:[#allocation3 + $0x290] sm:$0xff]
    %v132 = vld [vmem:[#allocation3 + $0x298] sm:$0xff]
    %v133 = vld [vmem:[#allocation3 + $0x2a0] sm:$0xff]
    %v134 = vld [vmem:[#allocation3 + $0x2a8] sm:$0xff]
    %v135 = vld [vmem:[#allocation3 + $0x2b0] sm:$0xff]
    %v136 = vld [vmem:[#allocation3 + $0x2b8] sm:$0xff]
    %v137 = vld [vmem:[#allocation3 + $0x2c0] sm:$0xff]
    %v138 = vld [vmem:[#allocation3 + $0x2c8] sm:$0xff]
    %v139 = vld [vmem:[#allocation3 + $0x2d0] sm:$0xff]
    %v140 = vld [vmem:[#allocation3 + $0x2d8] sm:$0xff]
    %v141 = vld [vmem:[#allocation3 + $0x2e0] sm:$0xff]
    %v142 = vld [vmem:[#allocation3 + $0x2e8] sm:$0xff]
    %v143 = vld [vmem:[#allocation3 + $0x2f0] sm:$0xff]
    %v144 = vld [vmem:[#allocation3 + $0x2f8] sm:$0xff]
    %v145 = vld [vmem:[#allocation3 + $0x300] sm:$0xff]
    %v146 = vld [vmem:[#allocation3 + $0x308] sm:$0xff]
    %v147 = vld [vmem:[#allocation3 + $0x310] sm:$0xff]
    %v148 = vld [vmem:[#allocation3 + $0x318] sm:$0xff]
    %v149 = vld [vmem:[#allocation3 + $0x320] sm:$0xff]
    %v150 = vld [vmem:[#allocation3 + $0x328] sm:$0xff]
    %v151 = vld [vmem:[#allocation3 + $0x330] sm:$0xff]
    %v152 = vld [vmem:[#allocation3 + $0x338] sm:$0xff]
    %v153 = vld [vmem:[#allocation3 + $0x340] sm:$0xff]
    %v154 = vld [vmem:[#allocation3 + $0x348] sm:$0xff]
    %v155 = vld [vmem:[#allocation3 + $0x350] sm:$0xff]
    %v156 = vld [vmem:[#allocation3 + $0x358] sm:$0xff]
    %v157 = vld [vmem:[#allocation3 + $0x360] sm:$0xff]
    %v158 = vld [vmem:[#allocation3 + $0x368] sm:$0xff]
    %v159 = vld [vmem:[#allocation3 + $0x370] sm:$0xff]
    %v160 = vld [vmem:[#allocation3 + $0x378] sm:$0xff]
    %v161 = vld [vmem:[#allocation3 + $0x380] sm:$0xff]
    %v162 = vld [vmem:[#allocation3 + $0x388] sm:$0xff]
    %v163 = vld [vmem:[#allocation3 + $0x390] sm:$0xff]
    %v164 = vld [vmem:[#allocation3 + $0x398] sm:$0xff]
    %v165 = vld [vmem:[#allocation3 + $0x3a0] sm:$0xff]
    %v166 = vld [vmem:[#allocation3 + $0x3a8] sm:$0xff]
    %v167 = vld [vmem:[#allocation3 + $0x3b0] sm:$0xff]
    %v168 = vld [vmem:[#allocation3 + $0x3b8] sm:$0xff]
    %v169 = vld [vmem:[#allocation3 + $0x3c0] sm:$0xff]
    %v170 = vld [vmem:[#allocation3 + $0x3c8] sm:$0xff]
    %v171 = vld [vmem:[#allocation3 + $0x3d0] sm:$0xff]
    %v172 = vld [vmem:[#allocation3 + $0x3d8] sm:$0xff]
    %v173 = vld [vmem:[#allocation3 + $0x3e0] sm:$0xff]
    %v174 = vld [vmem:[#allocation3 + $0x3e8] sm:$0xff]
    %v175 = vld [vmem:[#allocation3 + $0x3f0] sm:$0xff]
    %v176 = vld [vmem:[#allocation3 + $0x3f8] sm:$0xff]
    %v177 = vld [vmem:[#allocation3 + $0x400] sm:$0xff]
    %v178 = vld [vmem:[#allocation3 + $0x408] sm:$0xff]
    %v179 = vld [vmem:[#allocation3 + $0x410] sm:$0xff]
    %v180 = vld [vmem:[#allocation3 + $0x418] sm:$0xff]
    %v181 = vld [vmem:[#allocation3 + $0x420] sm:$0xff]
    %v182 = vld [vmem:[#allocation3 + $0x428] sm:$0xff]
    %v183 = vld [vmem:[#allocation3 + $0x430] sm:$0xff]
    %v184 = vld [vmem:[#allocation3 + $0x438] sm:$0xff]
    %v185 = vld [vmem:[#allocation3 + $0x440] sm:$0xff]
    %v186 = vld [vmem:[#allocation3 + $0x448] sm:$0xff]
    %v187 = vld [vmem:[#allocation3 + $0x450] sm:$0xff]
    %v188 = vld [vmem:[#allocation3 + $0x458] sm:$0xff]
    %v189 = vld [vmem:[#allocation3 + $0x460] sm:$0xff]
    %v190 = vld [vmem:[#allocation3 + $0x468] sm:$0xff]
    %v191 = vld [vmem:[#allocation3 + $0x470] sm:$0xff]
    %v192 = vld [vmem:[#allocation3 + $0x478] sm:$0xff]
    %v193 = vld [vmem:[#allocation3 + $0x480] sm:$0xff]
    %v194 = vld [vmem:[#allocation3 + $0x488] sm:$0xff]
    %v195 = vld [vmem:[#allocation3 + $0x490] sm:$0xff]
    %v196 = vld [vmem:[#allocation3 + $0x498] sm:$0xff]
    %v197 = vld [vmem:[#allocation3 + $0x4a0] sm:$0xff]
    %v198 = vld [vmem:[#allocation3 + $0x4a8] sm:$0xff]
    %v199 = vld [vmem:[#allocation3 + $0x4b0] sm:$0xff]
    %v200 = vld [vmem:[#allocation3 + $0x4b8] sm:$0xff]
    %v201 = vld [vmem:[#allocation3 + $0x4c0] sm:$0xff]
    %v202 = vld [vmem:[#allocation3 + $0x4c8] sm:$0xff]
    %v203 = vld [vmem:[#allocation3 + $0x4d0] sm:$0xff]
    %v204 = vld [vmem:[#allocation3 + $0x4d8] sm:$0xff]
    %v205 = vld [vmem:[#allocation3 + $0x4e0] sm:$0xff]
    %v206 = vld [vmem:[#allocation3 + $0x4e8] sm:$0xff]
    %v207 = vld [vmem:[#allocation3 + $0x4f0] sm:$0xff]
    %v208 = vld [vmem:[#allocation3 + $0x4f8] sm:$0xff]
    %v209 = vld [vmem:[#allocation3 + $0x500] sm:$0xff]
    %v210 = vld [vmem:[#allocation3 + $0x508] sm:$0xff]
    %v211 = vld [vmem:[#allocation3 + $0x510] sm:$0xff]
    %v212 = vld [vmem:[#allocation3 + $0x518] sm:$0xff]
    %v213 = vld [vmem:[#allocation3 + $0x520] sm:$0xff]
    %v214 = vld [vmem:[#allocation3 + $0x528] sm:$0xff]
    %v215 = vld [vmem:[#allocation3 + $0x530] sm:$0xff]
    %v216 = vld [vmem:[#allocation3 + $0x538] sm:$0xff]
    %v217 = vld [vmem:[#allocation3 + $0x540] sm:$0xff]
    %v218 = vld [vmem:[#allocation3 + $0x548] sm:$0xff]
    %v219 = vld [vmem:[#allocation3 + $0x550] sm:$0xff]
    %v220 = vld [vmem:[#allocation3 + $0x558] sm:$0xff]
    %v221 = vld [vmem:[#allocation3 + $0x560] sm:$0xff]
    %v222 = vld [vmem:[#allocation3 + $0x568] sm:$0xff]
    %v223 = vld [vmem:[#allocation3 + $0x570] sm:$0xff]
    %v224 = vld [vmem:[#allocation3 + $0x578] sm:$0xff]
    %v225 = vld [vmem:[#allocation3 + $0x580] sm:$0xff]
    %v226 = vld [vmem:[#allocation3 + $0x588] sm:$0xff]
    %v227 = vld [vmem:[#allocation3 + $0x590] sm:$0xff]
    %v228 = vld [vmem:[#allocation3 + $0x598] sm:$0xff]
    %v229 = vld [vmem:[#allocation3 + $0x5a0] sm:$0xff]
    %v230 = vld [vmem:[#allocation3 + $0x5a8] sm:$0xff]
    %v231 = vld [vmem:[#allocation3 + $0x5b0] sm:$0xff]
    %v232 = vld [vmem:[#allocation3 + $0x5b8] sm:$0xff]
    %v233 = vld [vmem:[#allocation3 + $0x5c0] sm:$0xff]
    %v234 = vld [vmem:[#allocation3 + $0x5c8] sm:$0xff]
    %v235 = vld [vmem:[#allocation3 + $0x5d0] sm:$0xff]
    %v236 = vld [vmem:[#allocation3 + $0x5d8] sm:$0xff]
    %v237 = vld [vmem:[#allocation3 + $0x5e0] sm:$0xff]
    %v238 = vld [vmem:[#allocation3 + $0x5e8] sm:$0xff]
    %v239 = vld [vmem:[#allocation3 + $0x5f0] sm:$0xff]
    %v240 = vld [vmem:[#allocation3 + $0x5f8] sm:$0xff]
    %v241 = vld [vmem:[%s2] sm:$0xf]
    %v243 = vlaneseq
    %v244 = vshrl.u32 %v243, 7
    %v245 = vsub.s32 0, %v244
    %v246 = vrot.slane %v241, %v245
    %v247 = vlaneseq
    %v248 = vshrl.u32 %v247, 7
    %v249 = vsub.s32 1, %v248
    %v250 = vrot.slane %v241, %v249
    %v251 = vlaneseq
    %v252 = vshrl.u32 %v251, 7
    %v253 = vsub.s32 2, %v252
    %v254 = vrot.slane %v241, %v253
    %v255 = vlaneseq
    %v256 = vshrl.u32 %v255, 7
    %v257 = vsub.s32 3, %v256
    %v258 = vrot.slane %v241, %v257
    %v269 = vunpack.c.l.b16 %v43
    %v270 = vunpack.c.h.b16 %v43
    %v271 = vunpack.c.l.b16 %v44
    %v272 = vunpack.c.h.b16 %v44
    %v273 = vunpack.c.l.b16 %v45
    %v274 = vunpack.c.h.b16 %v45
    %v275 = vunpack.c.l.b16 %v46
    %v276 = vunpack.c.h.b16 %v46
    %v277 = vunpack.c.l.b16 %v47
    %v278 = vunpack.c.h.b16 %v47
    %v279 = vunpack.c.l.b16 %v48
    %v280 = vunpack.c.h.b16 %v48
    %v281 = vpack.c.b16 %v275, %v269
    %v282 = vpack.c.b16 %v276, %v270
    %v283 = vpack.c.b16 %v277, %v271
    %v284 = vpack.c.b16 %v278, %v272
    %v285 = vpack.c.b16 %v279, %v273
    %v286 = vpack.c.b16 %v280, %v274
    %v485 = vunpack.c.l.b16 %v49
    %v486 = vunpack.c.h.b16 %v49
    %v487 = vunpack.c.l.b16 %v50
    %v488 = vunpack.c.h.b16 %v50
    %v489 = vunpack.c.l.b16 %v51
    %v490 = vunpack.c.h.b16 %v51
    %v491 = vunpack.c.l.b16 %v52
    %v492 = vunpack.c.h.b16 %v52
    %v493 = vunpack.c.l.b16 %v53
    %v494 = vunpack.c.h.b16 %v53
    %v495 = vunpack.c.l.b16 %v54
    %v496 = vunpack.c.h.b16 %v54
    %v497 = vunpack.c.l.b16 %v55
    %v498 = vunpack.c.h.b16 %v55
    %v499 = vunpack.c.l.b16 %v56
    %v500 = vunpack.c.h.b16 %v56
    %v501 = vunpack.c.l.b16 %v57
    %v502 = vunpack.c.h.b16 %v57
    %v503 = vunpack.c.l.b16 %v58
    %v504 = vunpack.c.h.b16 %v58
    %v505 = vunpack.c.l.b16 %v59
    %v506 = vunpack.c.h.b16 %v59
    %v507 = vunpack.c.l.b16 %v60
    %v508 = vunpack.c.h.b16 %v60
    %v509 = vunpack.c.l.b16 %v61
    %v510 = vunpack.c.h.b16 %v61
    %v511 = vunpack.c.l.b16 %v62
    %v512 = vunpack.c.h.b16 %v62
    %v513 = vunpack.c.l.b16 %v63
    %v514 = vunpack.c.h.b16 %v63
    %v515 = vunpack.c.l.b16 %v64
    %v516 = vunpack.c.h.b16 %v64
    %v517 = vunpack.c.l.b16 %v65
    %v518 = vunpack.c.h.b16 %v65
    %v519 = vunpack.c.l.b16 %v66
    %v520 = vunpack.c.h.b16 %v66
    %v521 = vunpack.c.l.b16 %v67
    %v522 = vunpack.c.h.b16 %v67
    %v523 = vunpack.c.l.b16 %v68
    %v524 = vunpack.c.h.b16 %v68
    %v525 = vunpack.c.l.b16 %v69
    %v526 = vunpack.c.h.b16 %v69
    %v527 = vunpack.c.l.b16 %v70
    %v528 = vunpack.c.h.b16 %v70
    %v529 = vunpack.c.l.b16 %v71
    %v530 = vunpack.c.h.b16 %v71
    %v531 = vunpack.c.l.b16 %v72
    %v532 = vunpack.c.h.b16 %v72
    %v533 = vunpack.c.l.b16 %v73
    %v534 = vunpack.c.h.b16 %v73
    %v535 = vunpack.c.l.b16 %v74
    %v536 = vunpack.c.h.b16 %v74
    %v537 = vunpack.c.l.b16 %v75
    %v538 = vunpack.c.h.b16 %v75
    %v539 = vunpack.c.l.b16 %v76
    %v540 = vunpack.c.h.b16 %v76
    %v541 = vunpack.c.l.b16 %v77
    %v542 = vunpack.c.h.b16 %v77
    %v543 = vunpack.c.l.b16 %v78
    %v544 = vunpack.c.h.b16 %v78
    %v545 = vunpack.c.l.b16 %v79
    %v546 = vunpack.c.h.b16 %v79
    %v547 = vunpack.c.l.b16 %v80
    %v548 = vunpack.c.h.b16 %v80
    %v549 = vunpack.c.l.b16 %v81
    %v550 = vunpack.c.h.b16 %v81
    %v551 = vunpack.c.l.b16 %v82
    %v552 = vunpack.c.h.b16 %v82
    %v553 = vunpack.c.l.b16 %v83
    %v554 = vunpack.c.h.b16 %v83
    %v555 = vunpack.c.l.b16 %v84
    %v556 = vunpack.c.h.b16 %v84
    %v557 = vunpack.c.l.b16 %v85
    %v558 = vunpack.c.h.b16 %v85
    %v559 = vunpack.c.l.b16 %v86
    %v560 = vunpack.c.h.b16 %v86
    %v561 = vunpack.c.l.b16 %v87
    %v562 = vunpack.c.h.b16 %v87
    %v563 = vunpack.c.l.b16 %v88
    %v564 = vunpack.c.h.b16 %v88
    %v565 = vunpack.c.l.b16 %v89
    %v566 = vunpack.c.h.b16 %v89
    %v567 = vunpack.c.l.b16 %v90
    %v568 = vunpack.c.h.b16 %v90
    %v569 = vunpack.c.l.b16 %v91
    %v570 = vunpack.c.h.b16 %v91
    %v571 = vunpack.c.l.b16 %v92
    %v572 = vunpack.c.h.b16 %v92
    %v573 = vunpack.c.l.b16 %v93
    %v574 = vunpack.c.h.b16 %v93
    %v575 = vunpack.c.l.b16 %v94
    %v576 = vunpack.c.h.b16 %v94
    %v577 = vunpack.c.l.b16 %v95
    %v578 = vunpack.c.h.b16 %v95
    %v579 = vunpack.c.l.b16 %v96
    %v580 = vunpack.c.h.b16 %v96
    %v581 = vunpack.c.l.b16 %v97
    %v582 = vunpack.c.h.b16 %v97
    %v583 = vunpack.c.l.b16 %v98
    %v584 = vunpack.c.h.b16 %v98
    %v585 = vunpack.c.l.b16 %v99
    %v586 = vunpack.c.h.b16 %v99
    %v587 = vunpack.c.l.b16 %v100
    %v588 = vunpack.c.h.b16 %v100
    %v589 = vunpack.c.l.b16 %v101
    %v590 = vunpack.c.h.b16 %v101
    %v591 = vunpack.c.l.b16 %v102
    %v592 = vunpack.c.h.b16 %v102
    %v593 = vunpack.c.l.b16 %v103
    %v594 = vunpack.c.h.b16 %v103
    %v595 = vunpack.c.l.b16 %v104
    %v596 = vunpack.c.h.b16 %v104
    %v597 = vunpack.c.l.b16 %v105
    %v598 = vunpack.c.h.b16 %v105
    %v599 = vunpack.c.l.b16 %v106
    %v600 = vunpack.c.h.b16 %v106
    %v601 = vunpack.c.l.b16 %v107
    %v602 = vunpack.c.h.b16 %v107
    %v603 = vunpack.c.l.b16 %v108
    %v604 = vunpack.c.h.b16 %v108
    %v605 = vunpack.c.l.b16 %v109
    %v606 = vunpack.c.h.b16 %v109
    %v607 = vunpack.c.l.b16 %v110
    %v608 = vunpack.c.h.b16 %v110
    %v609 = vunpack.c.l.b16 %v111
    %v610 = vunpack.c.h.b16 %v111
    %v611 = vunpack.c.l.b16 %v112
    %v612 = vunpack.c.h.b16 %v112
    %v613 = vunpack.c.l.b16 %v113
    %v614 = vunpack.c.h.b16 %v113
    %v615 = vunpack.c.l.b16 %v114
    %v616 = vunpack.c.h.b16 %v114
    %v617 = vunpack.c.l.b16 %v115
    %v618 = vunpack.c.h.b16 %v115
    %v619 = vunpack.c.l.b16 %v116
    %v620 = vunpack.c.h.b16 %v116
    %v621 = vunpack.c.l.b16 %v117
    %v622 = vunpack.c.h.b16 %v117
    %v623 = vunpack.c.l.b16 %v118
    %v624 = vunpack.c.h.b16 %v118
    %v625 = vunpack.c.l.b16 %v119
    %v626 = vunpack.c.h.b16 %v119
    %v627 = vunpack.c.l.b16 %v120
    %v628 = vunpack.c.h.b16 %v120
    %v629 = vunpack.c.l.b16 %v121
    %v630 = vunpack.c.h.b16 %v121
    %v631 = vunpack.c.l.b16 %v122
    %v632 = vunpack.c.h.b16 %v122
    %v633 = vunpack.c.l.b16 %v123
    %v634 = vunpack.c.h.b16 %v123
    %v635 = vunpack.c.l.b16 %v124
    %v636 = vunpack.c.h.b16 %v124
    %v637 = vunpack.c.l.b16 %v125
    %v638 = vunpack.c.h.b16 %v125
    %v639 = vunpack.c.l.b16 %v126
    %v640 = vunpack.c.h.b16 %v126
    %v641 = vunpack.c.l.b16 %v127
    %v642 = vunpack.c.h.b16 %v127
    %v643 = vunpack.c.l.b16 %v128
    %v644 = vunpack.c.h.b16 %v128
    %v645 = vunpack.c.l.b16 %v129
    %v646 = vunpack.c.h.b16 %v129
    %v647 = vunpack.c.l.b16 %v130
    %v648 = vunpack.c.h.b16 %v130
    %v649 = vunpack.c.l.b16 %v131
    %v650 = vunpack.c.h.b16 %v131
    %v651 = vunpack.c.l.b16 %v132
    %v652 = vunpack.c.h.b16 %v132
    %v653 = vunpack.c.l.b16 %v133
    %v654 = vunpack.c.h.b16 %v133
    %v655 = vunpack.c.l.b16 %v134
    %v656 = vunpack.c.h.b16 %v134
    %v657 = vunpack.c.l.b16 %v135
    %v658 = vunpack.c.h.b16 %v135
    %v659 = vunpack.c.l.b16 %v136
    %v660 = vunpack.c.h.b16 %v136
    %v661 = vunpack.c.l.b16 %v137
    %v662 = vunpack.c.h.b16 %v137
    %v663 = vunpack.c.l.b16 %v138
    %v664 = vunpack.c.h.b16 %v138
    %v665 = vunpack.c.l.b16 %v139
    %v666 = vunpack.c.h.b16 %v139
    %v667 = vunpack.c.l.b16 %v140
    %v668 = vunpack.c.h.b16 %v140
    %v669 = vunpack.c.l.b16 %v141
    %v670 = vunpack.c.h.b16 %v141
    %v671 = vunpack.c.l.b16 %v142
    %v672 = vunpack.c.h.b16 %v142
    %v673 = vunpack.c.l.b16 %v143
    %v674 = vunpack.c.h.b16 %v143
    %v675 = vunpack.c.l.b16 %v144
    %v676 = vunpack.c.h.b16 %v144
    %v677 = vunpack.c.l.b16 %v145
    %v678 = vunpack.c.h.b16 %v145
    %v679 = vunpack.c.l.b16 %v146
    %v680 = vunpack.c.h.b16 %v146
    %v681 = vunpack.c.l.b16 %v147
    %v682 = vunpack.c.h.b16 %v147
    %v683 = vunpack.c.l.b16 %v148
    %v684 = vunpack.c.h.b16 %v148
    %v685 = vunpack.c.l.b16 %v149
    %v686 = vunpack.c.h.b16 %v149
    %v687 = vunpack.c.l.b16 %v150
    %v688 = vunpack.c.h.b16 %v150
    %v689 = vunpack.c.l.b16 %v151
    %v690 = vunpack.c.h.b16 %v151
    %v691 = vunpack.c.l.b16 %v152
    %v692 = vunpack.c.h.b16 %v152
    %v693 = vunpack.c.l.b16 %v153
    %v694 = vunpack.c.h.b16 %v153
    %v695 = vunpack.c.l.b16 %v154
    %v696 = vunpack.c.h.b16 %v154
    %v697 = vunpack.c.l.b16 %v155
    %v698 = vunpack.c.h.b16 %v155
    %v699 = vunpack.c.l.b16 %v156
    %v700 = vunpack.c.h.b16 %v156
    %v701 = vunpack.c.l.b16 %v157
    %v702 = vunpack.c.h.b16 %v157
    %v703 = vunpack.c.l.b16 %v158
    %v704 = vunpack.c.h.b16 %v158
    %v705 = vunpack.c.l.b16 %v159
    %v706 = vunpack.c.h.b16 %v159
    %v707 = vunpack.c.l.b16 %v160
    %v708 = vunpack.c.h.b16 %v160
    %v709 = vunpack.c.l.b16 %v161
    %v710 = vunpack.c.h.b16 %v161
    %v711 = vunpack.c.l.b16 %v162
    %v712 = vunpack.c.h.b16 %v162
    %v713 = vunpack.c.l.b16 %v163
    %v714 = vunpack.c.h.b16 %v163
    %v715 = vunpack.c.l.b16 %v164
    %v716 = vunpack.c.h.b16 %v164
    %v717 = vunpack.c.l.b16 %v165
    %v718 = vunpack.c.h.b16 %v165
    %v719 = vunpack.c.l.b16 %v166
    %v720 = vunpack.c.h.b16 %v166
    %v721 = vunpack.c.l.b16 %v167
    %v722 = vunpack.c.h.b16 %v167
    %v723 = vunpack.c.l.b16 %v168
    %v724 = vunpack.c.h.b16 %v168
    %v725 = vunpack.c.l.b16 %v169
    %v726 = vunpack.c.h.b16 %v169
    %v727 = vunpack.c.l.b16 %v170
    %v728 = vunpack.c.h.b16 %v170
    %v729 = vunpack.c.l.b16 %v171
    %v730 = vunpack.c.h.b16 %v171
    %v731 = vunpack.c.l.b16 %v172
    %v732 = vunpack.c.h.b16 %v172
    %v733 = vunpack.c.l.b16 %v173
    %v734 = vunpack.c.h.b16 %v173
    %v735 = vunpack.c.l.b16 %v174
    %v736 = vunpack.c.h.b16 %v174
    %v737 = vunpack.c.l.b16 %v175
    %v738 = vunpack.c.h.b16 %v175
    %v739 = vunpack.c.l.b16 %v176
    %v740 = vunpack.c.h.b16 %v176
    %v741 = vunpack.c.l.b16 %v177
    %v742 = vunpack.c.h.b16 %v177
    %v743 = vunpack.c.l.b16 %v178
    %v744 = vunpack.c.h.b16 %v178
    %v745 = vunpack.c.l.b16 %v179
    %v746 = vunpack.c.h.b16 %v179
    %v747 = vunpack.c.l.b16 %v180
    %v748 = vunpack.c.h.b16 %v180
    %v749 = vunpack.c.l.b16 %v181
    %v750 = vunpack.c.h.b16 %v181
    %v751 = vunpack.c.l.b16 %v182
    %v752 = vunpack.c.h.b16 %v182
    %v753 = vunpack.c.l.b16 %v183
    %v754 = vunpack.c.h.b16 %v183
    %v755 = vunpack.c.l.b16 %v184
    %v756 = vunpack.c.h.b16 %v184
    %v757 = vunpack.c.l.b16 %v185
    %v758 = vunpack.c.h.b16 %v185
    %v759 = vunpack.c.l.b16 %v186
    %v760 = vunpack.c.h.b16 %v186
    %v761 = vunpack.c.l.b16 %v187
    %v762 = vunpack.c.h.b16 %v187
    %v763 = vunpack.c.l.b16 %v188
    %v764 = vunpack.c.h.b16 %v188
    %v765 = vunpack.c.l.b16 %v189
    %v766 = vunpack.c.h.b16 %v189
    %v767 = vunpack.c.l.b16 %v190
    %v768 = vunpack.c.h.b16 %v190
    %v769 = vunpack.c.l.b16 %v191
    %v770 = vunpack.c.h.b16 %v191
    %v771 = vunpack.c.l.b16 %v192
    %v772 = vunpack.c.h.b16 %v192
    %v773 = vunpack.c.l.b16 %v193
    %v774 = vunpack.c.h.b16 %v193
    %v775 = vunpack.c.l.b16 %v194
    %v776 = vunpack.c.h.b16 %v194
    %v777 = vunpack.c.l.b16 %v195
    %v778 = vunpack.c.h.b16 %v195
    %v779 = vunpack.c.l.b16 %v196
    %v780 = vunpack.c.h.b16 %v196
    %v781 = vunpack.c.l.b16 %v197
    %v782 = vunpack.c.h.b16 %v197
    %v783 = vunpack.c.l.b16 %v198
    %v784 = vunpack.c.h.b16 %v198
    %v785 = vunpack.c.l.b16 %v199
    %v786 = vunpack.c.h.b16 %v199
    %v787 = vunpack.c.l.b16 %v200
    %v788 = vunpack.c.h.b16 %v200
    %v789 = vunpack.c.l.b16 %v201
    %v790 = vunpack.c.h.b16 %v201
    %v791 = vunpack.c.l.b16 %v202
    %v792 = vunpack.c.h.b16 %v202
    %v793 = vunpack.c.l.b16 %v203
    %v794 = vunpack.c.h.b16 %v203
    %v795 = vunpack.c.l.b16 %v204
    %v796 = vunpack.c.h.b16 %v204
    %v797 = vunpack.c.l.b16 %v205
    %v798 = vunpack.c.h.b16 %v205
    %v799 = vunpack.c.l.b16 %v206
    %v800 = vunpack.c.h.b16 %v206
    %v801 = vunpack.c.l.b16 %v207
    %v802 = vunpack.c.h.b16 %v207
    %v803 = vunpack.c.l.b16 %v208
    %v804 = vunpack.c.h.b16 %v208
    %v805 = vunpack.c.l.b16 %v209
    %v806 = vunpack.c.h.b16 %v209
    %v807 = vunpack.c.l.b16 %v210
    %v808 = vunpack.c.h.b16 %v210
    %v809 = vunpack.c.l.b16 %v211
    %v810 = vunpack.c.h.b16 %v211
    %v811 = vunpack.c.l.b16 %v212
    %v812 = vunpack.c.h.b16 %v212
    %v813 = vunpack.c.l.b16 %v213
    %v814 = vunpack.c.h.b16 %v213
    %v815 = vunpack.c.l.b16 %v214
    %v816 = vunpack.c.h.b16 %v214
    %v817 = vunpack.c.l.b16 %v215
    %v818 = vunpack.c.h.b16 %v215
    %v819 = vunpack.c.l.b16 %v216
    %v820 = vunpack.c.h.b16 %v216
    %v821 = vunpack.c.l.b16 %v217
    %v822 = vunpack.c.h.b16 %v217
    %v823 = vunpack.c.l.b16 %v218
    %v824 = vunpack.c.h.b16 %v218
    %v825 = vunpack.c.l.b16 %v219
    %v826 = vunpack.c.h.b16 %v219
    %v827 = vunpack.c.l.b16 %v220
    %v828 = vunpack.c.h.b16 %v220
    %v829 = vunpack.c.l.b16 %v221
    %v830 = vunpack.c.h.b16 %v221
    %v831 = vunpack.c.l.b16 %v222
    %v832 = vunpack.c.h.b16 %v222
    %v833 = vunpack.c.l.b16 %v223
    %v834 = vunpack.c.h.b16 %v223
    %v835 = vunpack.c.l.b16 %v224
    %v836 = vunpack.c.h.b16 %v224
    %v837 = vunpack.c.l.b16 %v225
    %v838 = vunpack.c.h.b16 %v225
    %v839 = vunpack.c.l.b16 %v226
    %v840 = vunpack.c.h.b16 %v226
    %v841 = vunpack.c.l.b16 %v227
    %v842 = vunpack.c.h.b16 %v227
    %v843 = vunpack.c.l.b16 %v228
    %v844 = vunpack.c.h.b16 %v228
    %v845 = vunpack.c.l.b16 %v229
    %v846 = vunpack.c.h.b16 %v229
    %v847 = vunpack.c.l.b16 %v230
    %v848 = vunpack.c.h.b16 %v230
    %v849 = vunpack.c.l.b16 %v231
    %v850 = vunpack.c.h.b16 %v231
    %v851 = vunpack.c.l.b16 %v232
    %v852 = vunpack.c.h.b16 %v232
    %v853 = vunpack.c.l.b16 %v233
    %v854 = vunpack.c.h.b16 %v233
    %v855 = vunpack.c.l.b16 %v234
    %v856 = vunpack.c.h.b16 %v234
    %v857 = vunpack.c.l.b16 %v235
    %v858 = vunpack.c.h.b16 %v235
    %v859 = vunpack.c.l.b16 %v236
    %v860 = vunpack.c.h.b16 %v236
    %v861 = vunpack.c.l.b16 %v237
    %v862 = vunpack.c.h.b16 %v237
    %v863 = vunpack.c.l.b16 %v238
    %v864 = vunpack.c.h.b16 %v238
    %v865 = vunpack.c.l.b16 %v239
    %v866 = vunpack.c.h.b16 %v239
    %v867 = vunpack.c.l.b16 %v240
    %v868 = vunpack.c.h.b16 %v240
    %v869 = vpack.c.b16 %v489, %v485
    %v870 = vpack.c.b16 %v490, %v486
    %v871 = vpack.c.b16 %v491, %v487
    %v872 = vpack.c.b16 %v492, %v488
    %v873 = vpack.c.b16 %v497, %v493
    %v874 = vpack.c.b16 %v498, %v494
    %v875 = vpack.c.b16 %v499, %v495
    %v876 = vpack.c.b16 %v500, %v496
    %v877 = vpack.c.b16 %v505, %v501
    %v878 = vpack.c.b16 %v506, %v502
    %v879 = vpack.c.b16 %v507, %v503
    %v880 = vpack.c.b16 %v508, %v504
    %v881 = vpack.c.b16 %v513, %v509
    %v882 = vpack.c.b16 %v514, %v510
    %v883 = vpack.c.b16 %v515, %v511
    %v884 = vpack.c.b16 %v516, %v512
    %v885 = vpack.c.b16 %v521, %v517
    %v886 = vpack.c.b16 %v522, %v518
    %v887 = vpack.c.b16 %v523, %v519
    %v888 = vpack.c.b16 %v524, %v520
    %v889 = vpack.c.b16 %v529, %v525
    %v890 = vpack.c.b16 %v530, %v526
    %v891 = vpack.c.b16 %v531, %v527
    %v892 = vpack.c.b16 %v532, %v528
    %v893 = vpack.c.b16 %v537, %v533
    %v894 = vpack.c.b16 %v538, %v534
    %v895 = vpack.c.b16 %v539, %v535
    %v896 = vpack.c.b16 %v540, %v536
    %v897 = vpack.c.b16 %v545, %v541
    %v898 = vpack.c.b16 %v546, %v542
    %v899 = vpack.c.b16 %v547, %v543
    %v900 = vpack.c.b16 %v548, %v544
    %v901 = vpack.c.b16 %v553, %v549
    %v902 = vpack.c.b16 %v554, %v550
    %v903 = vpack.c.b16 %v555, %v551
    %v904 = vpack.c.b16 %v556, %v552
    %v905 = vpack.c.b16 %v561, %v557
    %v906 = vpack.c.b16 %v562, %v558
    %v907 = vpack.c.b16 %v563, %v559
    %v908 = vpack.c.b16 %v564, %v560
    %v909 = vpack.c.b16 %v569, %v565
    %v910 = vpack.c.b16 %v570, %v566
    %v911 = vpack.c.b16 %v571, %v567
    %v912 = vpack.c.b16 %v572, %v568
    %v913 = vpack.c.b16 %v577, %v573
    %v914 = vpack.c.b16 %v578, %v574
    %v915 = vpack.c.b16 %v579, %v575
    %v916 = vpack.c.b16 %v580, %v576
    %v917 = vpack.c.b16 %v585, %v581
    %v918 = vpack.c.b16 %v586, %v582
    %v919 = vpack.c.b16 %v587, %v583
    %v920 = vpack.c.b16 %v588, %v584
    %v921 = vpack.c.b16 %v593, %v589
    %v922 = vpack.c.b16 %v594, %v590
    %v923 = vpack.c.b16 %v595, %v591
    %v924 = vpack.c.b16 %v596, %v592
    %v925 = vpack.c.b16 %v601, %v597
    %v926 = vpack.c.b16 %v602, %v598
    %v927 = vpack.c.b16 %v603, %v599
    %v928 = vpack.c.b16 %v604, %v600
    %v929 = vpack.c.b16 %v609, %v605
    %v930 = vpack.c.b16 %v610, %v606
    %v931 = vpack.c.b16 %v611, %v607
    %v932 = vpack.c.b16 %v612, %v608
    %v933 = vpack.c.b16 %v617, %v613
    %v934 = vpack.c.b16 %v618, %v614
    %v935 = vpack.c.b16 %v619, %v615
    %v936 = vpack.c.b16 %v620, %v616
    %v937 = vpack.c.b16 %v625, %v621
    %v938 = vpack.c.b16 %v626, %v622
    %v939 = vpack.c.b16 %v627, %v623
    %v940 = vpack.c.b16 %v628, %v624
    %v941 = vpack.c.b16 %v633, %v629
    %v942 = vpack.c.b16 %v634, %v630
    %v943 = vpack.c.b16 %v635, %v631
    %v944 = vpack.c.b16 %v636, %v632
    %v945 = vpack.c.b16 %v641, %v637
    %v946 = vpack.c.b16 %v642, %v638
    %v947 = vpack.c.b16 %v643, %v639
    %v948 = vpack.c.b16 %v644, %v640
    %v949 = vpack.c.b16 %v649, %v645
    %v950 = vpack.c.b16 %v650, %v646
    %v951 = vpack.c.b16 %v651, %v647
    %v952 = vpack.c.b16 %v652, %v648
    %v953 = vpack.c.b16 %v657, %v653
    %v954 = vpack.c.b16 %v658, %v654
    %v955 = vpack.c.b16 %v659, %v655
    %v956 = vpack.c.b16 %v660, %v656
    %v957 = vpack.c.b16 %v665, %v661
    %v958 = vpack.c.b16 %v666, %v662
    %v959 = vpack.c.b16 %v667, %v663
    %v960 = vpack.c.b16 %v668, %v664
    %v961 = vpack.c.b16 %v673, %v669
    %v962 = vpack.c.b16 %v674, %v670
    %v963 = vpack.c.b16 %v675, %v671
    %v964 = vpack.c.b16 %v676, %v672
    %v965 = vpack.c.b16 %v681, %v677
    %v966 = vpack.c.b16 %v682, %v678
    %v967 = vpack.c.b16 %v683, %v679
    %v968 = vpack.c.b16 %v684, %v680
    %v969 = vpack.c.b16 %v689, %v685
    %v970 = vpack.c.b16 %v690, %v686
    %v971 = vpack.c.b16 %v691, %v687
    %v972 = vpack.c.b16 %v692, %v688
    %v973 = vpack.c.b16 %v697, %v693
    %v974 = vpack.c.b16 %v698, %v694
    %v975 = vpack.c.b16 %v699, %v695
    %v976 = vpack.c.b16 %v700, %v696
    %v977 = vpack.c.b16 %v705, %v701
    %v978 = vpack.c.b16 %v706, %v702
    %v979 = vpack.c.b16 %v707, %v703
    %v980 = vpack.c.b16 %v708, %v704
    %v981 = vpack.c.b16 %v713, %v709
    %v982 = vpack.c.b16 %v714, %v710
    %v983 = vpack.c.b16 %v715, %v711
    %v984 = vpack.c.b16 %v716, %v712
    %v985 = vpack.c.b16 %v721, %v717
    %v986 = vpack.c.b16 %v722, %v718
    %v987 = vpack.c.b16 %v723, %v719
    %v988 = vpack.c.b16 %v724, %v720
    %v989 = vpack.c.b16 %v729, %v725
    %v990 = vpack.c.b16 %v730, %v726
    %v991 = vpack.c.b16 %v731, %v727
    %v992 = vpack.c.b16 %v732, %v728
    %v993 = vpack.c.b16 %v737, %v733
    %v994 = vpack.c.b16 %v738, %v734
    %v995 = vpack.c.b16 %v739, %v735
    %v996 = vpack.c.b16 %v740, %v736
    %v997 = vpack.c.b16 %v745, %v741
    %v998 = vpack.c.b16 %v746, %v742
    %v999 = vpack.c.b16 %v747, %v743
    %v1000 = vpack.c.b16 %v748, %v744
    %v1001 = vpack.c.b16 %v753, %v749
    %v1002 = vpack.c.b16 %v754, %v750
    %v1003 = vpack.c.b16 %v755, %v751
    %v1004 = vpack.c.b16 %v756, %v752
    %v1005 = vpack.c.b16 %v761, %v757
    %v1006 = vpack.c.b16 %v762, %v758
    %v1007 = vpack.c.b16 %v763, %v759
    %v1008 = vpack.c.b16 %v764, %v760
    %v1009 = vpack.c.b16 %v769, %v765
    %v1010 = vpack.c.b16 %v770, %v766
    %v1011 = vpack.c.b16 %v771, %v767
    %v1012 = vpack.c.b16 %v772, %v768
    %v1013 = vpack.c.b16 %v777, %v773
    %v1014 = vpack.c.b16 %v778, %v774
    %v1015 = vpack.c.b16 %v779, %v775
    %v1016 = vpack.c.b16 %v780, %v776
    %v1017 = vpack.c.b16 %v785, %v781
    %v1018 = vpack.c.b16 %v786, %v782
    %v1019 = vpack.c.b16 %v787, %v783
    %v1020 = vpack.c.b16 %v788, %v784
    %v1021 = vpack.c.b16 %v793, %v789
    %v1022 = vpack.c.b16 %v794, %v790
    %v1023 = vpack.c.b16 %v795, %v791
    %v1024 = vpack.c.b16 %v796, %v792
    %v1025 = vpack.c.b16 %v801, %v797
    %v1026 = vpack.c.b16 %v802, %v798
    %v1027 = vpack.c.b16 %v803, %v799
    %v1028 = vpack.c.b16 %v804, %v800
    %v1029 = vpack.c.b16 %v809, %v805
    %v1030 = vpack.c.b16 %v810, %v806
    %v1031 = vpack.c.b16 %v811, %v807
    %v1032 = vpack.c.b16 %v812, %v808
    %v1033 = vpack.c.b16 %v817, %v813
    %v1034 = vpack.c.b16 %v818, %v814
    %v1035 = vpack.c.b16 %v819, %v815
    %v1036 = vpack.c.b16 %v820, %v816
    %v1037 = vpack.c.b16 %v825, %v821
    %v1038 = vpack.c.b16 %v826, %v822
    %v1039 = vpack.c.b16 %v827, %v823
    %v1040 = vpack.c.b16 %v828, %v824
    %v1041 = vpack.c.b16 %v833, %v829
    %v1042 = vpack.c.b16 %v834, %v830
    %v1043 = vpack.c.b16 %v835, %v831
    %v1044 = vpack.c.b16 %v836, %v832
    %v1045 = vpack.c.b16 %v841, %v837
    %v1046 = vpack.c.b16 %v842, %v838
    %v1047 = vpack.c.b16 %v843, %v839
    %v1048 = vpack.c.b16 %v844, %v840
    %v1049 = vpack.c.b16 %v849, %v845
    %v1050 = vpack.c.b16 %v850, %v846
    %v1051 = vpack.c.b16 %v851, %v847
    %v1052 = vpack.c.b16 %v852, %v848
    %v1053 = vpack.c.b16 %v857, %v853
    %v1054 = vpack.c.b16 %v858, %v854
    %v1055 = vpack.c.b16 %v859, %v855
    %v1056 = vpack.c.b16 %v860, %v856
    %v1057 = vpack.c.b16 %v865, %v861
    %v1058 = vpack.c.b16 %v866, %v862
    %v1059 = vpack.c.b16 %v867, %v863
    %v1060 = vpack.c.b16 %v868, %v864
    %1253 = vmatprep.subr.bf16.mxu0 %v870
    %1254 = vmatpush1.bf16.msra.mxu0 %v869
    %1255 = vmatprep.subr.bf16.mxu0 %v874
    %1256 = vmatpush1.bf16.msra.mxu0 %v873
    %1257 = vmatprep.subr.bf16.mxu0 %v878
    %1258 = vmatpush1.bf16.msra.mxu0 %v877
    %1259 = vmatprep.subr.bf16.mxu0 %v882
    %1260 = vmatpush1.bf16.msra.mxu0 %v881
    %1261 = vmatprep.subr.bf16.mxu0 %v886
    %1262 = vmatpush1.bf16.msra.mxu0 %v885
    %1263 = vmatprep.subr.bf16.mxu0 %v890
    %1264 = vmatpush1.bf16.msra.mxu0 %v889
    %1265 = vmatprep.subr.bf16.mxu0 %v894
    %1266 = vmatpush1.bf16.msra.mxu0 %v893
    %1267 = vmatprep.subr.bf16.mxu0 %v898
    %1268 = vmatpush1.bf16.msra.mxu0 %v897
    %1269 = vmatprep.subr.bf16.mxu0 %v902
    %1270 = vmatpush1.bf16.msra.mxu0 %v901
    %1271 = vmatprep.subr.bf16.mxu0 %v906
    %1272 = vmatpush1.bf16.msra.mxu0 %v905
    %1273 = vmatprep.subr.bf16.mxu0 %v910
    %1274 = vmatpush1.bf16.msra.mxu0 %v909
    %1275 = vmatprep.subr.bf16.mxu0 %v914
    %1276 = vmatpush1.bf16.msra.mxu0 %v913
    %1277 = vmatprep.subr.bf16.mxu0 %v918
    %1278 = vmatpush1.bf16.msra.mxu0 %v917
    %1279 = vmatprep.subr.bf16.mxu0 %v922
    %1280 = vmatpush1.bf16.msra.mxu0 %v921
    %1281 = vmatprep.subr.bf16.mxu0 %v926
    %1282 = vmatpush1.bf16.msra.mxu0 %v925
    %1283 = vmatprep.subr.bf16.mxu0 %v930
    %1284 = vmatpush1.bf16.msra.mxu0 %v929
    %1285 = vmatprep.mubr.bf16.mxu0 %v282
    %1286 = vmatmul.mubr.bf16.gmra.mrb[0].mxu0 %v281
    %v1287 = vpop.f32.mrb[0].mxu0
    %v1288 = vadd.f32 %v246, %v1287
    %v1289 = vpop.f32.mrb[0].mxu0
    %v1290 = vadd.f32 %v250, %v1289
    %v1291 = vpop.f32.mrb[0].mxu0
    %v1292 = vadd.f32 %v246, %v1291
    %v1293 = vpop.f32.mrb[0].mxu0
    %v1294 = vadd.f32 %v250, %v1293
    %1295 = vdwg.mxu0
    %1296 = vmatprep.subr.bf16.mxu0 %v934
    %1297 = vmatpush1.bf16.msra.mxu0 %v933
    %1298 = vmatprep.subr.bf16.mxu0 %v938
    %1299 = vmatpush1.bf16.msra.mxu0 %v937
    %1300 = vmatprep.subr.bf16.mxu0 %v942
    %1301 = vmatpush1.bf16.msra.mxu0 %v941
    %1302 = vmatprep.subr.bf16.mxu0 %v946
    %1303 = vmatpush1.bf16.msra.mxu0 %v945
    %1304 = vmatprep.subr.bf16.mxu0 %v950
    %1305 = vmatpush1.bf16.msra.mxu0 %v949
    %1306 = vmatprep.subr.bf16.mxu0 %v954
    %1307 = vmatpush1.bf16.msra.mxu0 %v953
    %1308 = vmatprep.subr.bf16.mxu0 %v958
    %1309 = vmatpush1.bf16.msra.mxu0 %v957
    %1310 = vmatprep.subr.bf16.mxu0 %v962
    %1311 = vmatpush1.bf16.msra.mxu0 %v961
    %1312 = vmatprep.subr.bf16.mxu0 %v966
    %1313 = vmatpush1.bf16.msra.mxu0 %v965
    %1314 = vmatprep.subr.bf16.mxu0 %v970
    %1315 = vmatpush1.bf16.msra.mxu0 %v969
    %1316 = vmatprep.subr.bf16.mxu0 %v974
    %1317 = vmatpush1.bf16.msra.mxu0 %v973
    %1318 = vmatprep.subr.bf16.mxu0 %v978
    %1319 = vmatpush1.bf16.msra.mxu0 %v977
    %1320 = vmatprep.subr.bf16.mxu0 %v982
    %1321 = vmatpush1.bf16.msra.mxu0 %v981
    %1322 = vmatprep.subr.bf16.mxu0 %v986
    %1323 = vmatpush1.bf16.msra.mxu0 %v985
    %1324 = vmatprep.subr.bf16.mxu0 %v990
    %1325 = vmatpush1.bf16.msra.mxu0 %v989
    %1326 = vmatprep.subr.bf16.mxu0 %v994
    %1327 = vmatpush1.bf16.msra.mxu0 %v993
    %1328 = vmatprep.mubr.bf16.mxu0 %v284
    %1329 = vmatmul.mubr.bf16.gmra.mrb[0].mxu0 %v283
    %v1330 = vpop.f32.mrb[0].mxu0
    %v1331 = vadd.f32 %v1288, %v1330
    %v1332 = vpop.f32.mrb[0].mxu0
    %v1333 = vadd.f32 %v1290, %v1332
    %v1334 = vpop.f32.mrb[0].mxu0
    %v1335 = vadd.f32 %v1292, %v1334
    %v1336 = vpop.f32.mrb[0].mxu0
    %v1337 = vadd.f32 %v1294, %v1336
    %1338 = vdwg.mxu0
    %1339 = vmatprep.subr.bf16.mxu0 %v998
    %1340 = vmatpush1.bf16.msra.mxu0 %v997
    %1341 = vmatprep.subr.bf16.mxu0 %v1002
    %1342 = vmatpush1.bf16.msra.mxu0 %v1001
    %1343 = vmatprep.subr.bf16.mxu0 %v1006
    %1344 = vmatpush1.bf16.msra.mxu0 %v1005
    %1345 = vmatprep.subr.bf16.mxu0 %v1010
    %1346 = vmatpush1.bf16.msra.mxu0 %v1009
    %1347 = vmatprep.subr.bf16.mxu0 %v1014
    %1348 = vmatpush1.bf16.msra.mxu0 %v1013
    %1349 = vmatprep.subr.bf16.mxu0 %v1018
    %1350 = vmatpush1.bf16.msra.mxu0 %v1017
    %1351 = vmatprep.subr.bf16.mxu0 %v1022
    %1352 = vmatpush1.bf16.msra.mxu0 %v1021
    %1353 = vmatprep.subr.bf16.mxu0 %v1026
    %1354 = vmatpush1.bf16.msra.mxu0 %v1025
    %1355 = vmatprep.subr.bf16.mxu0 %v1030
    %1356 = vmatpush1.bf16.msra.mxu0 %v1029
    %1357 = vmatprep.subr.bf16.mxu0 %v1034
    %1358 = vmatpush1.bf16.msra.mxu0 %v1033
    %1359 = vmatprep.subr.bf16.mxu0 %v1038
    %1360 = vmatpush1.bf16.msra.mxu0 %v1037
    %1361 = vmatprep.subr.bf16.mxu0 %v1042
    %1362 = vmatpush1.bf16.msra.mxu0 %v1041
    %1363 = vmatprep.subr.bf16.mxu0 %v1046
    %1364 = vmatpush1.bf16.msra.mxu0 %v1045
    %1365 = vmatprep.subr.bf16.mxu0 %v1050
    %1366 = vmatpush1.bf16.msra.mxu0 %v1049
    %1367 = vmatprep.subr.bf16.mxu0 %v1054
    %1368 = vmatpush1.bf16.msra.mxu0 %v1053
    %1369 = vmatprep.subr.bf16.mxu0 %v1058
    %1370 = vmatpush1.bf16.msra.mxu0 %v1057
    %1371 = vmatprep.mubr.bf16.mxu0 %v286
    %1372 = vmatmul.mubr.bf16.gmra.mrb[0].mxu0 %v285
    %v1373 = vpop.f32.mrb[0].mxu0
    %v1374 = vadd.f32 %v1331, %v1373
    %v1375 = vpop.f32.mrb[0].mxu0
    %v1376 = vadd.f32 %v1333, %v1375
    %v1377 = vpop.f32.mrb[0].mxu0
    %v1378 = vadd.f32 %v1335, %v1377
    %v1379 = vpop.f32.mrb[0].mxu0
    %v1380 = vadd.f32 %v1337, %v1379
    %1381 = vdwg.mxu0
    %1382 = vmatprep.subr.bf16.mxu0 %v872
    %1383 = vmatpush1.bf16.msra.mxu0 %v871
    %1384 = vmatprep.subr.bf16.mxu0 %v876
    %1385 = vmatpush1.bf16.msra.mxu0 %v875
    %1386 = vmatprep.subr.bf16.mxu0 %v880
    %1387 = vmatpush1.bf16.msra.mxu0 %v879
    %1388 = vmatprep.subr.bf16.mxu0 %v884
    %1389 = vmatpush1.bf16.msra.mxu0 %v883
    %1390 = vmatprep.subr.bf16.mxu0 %v888
    %1391 = vmatpush1.bf16.msra.mxu0 %v887
    %1392 = vmatprep.subr.bf16.mxu0 %v892
    %1393 = vmatpush1.bf16.msra.mxu0 %v891
    %1394 = vmatprep.subr.bf16.mxu0 %v896
    %1395 = vmatpush1.bf16.msra.mxu0 %v895
    %1396 = vmatprep.subr.bf16.mxu0 %v900
    %1397 = vmatpush1.bf16.msra.mxu0 %v899
    %1398 = vmatprep.subr.bf16.mxu0 %v904
    %1399 = vmatpush1.bf16.msra.mxu0 %v903
    %1400 = vmatprep.subr.bf16.mxu0 %v908
    %1401 = vmatpush1.bf16.msra.mxu0 %v907
    %1402 = vmatprep.subr.bf16.mxu0 %v912
    %1403 = vmatpush1.bf16.msra.mxu0 %v911
    %1404 = vmatprep.subr.bf16.mxu0 %v916
    %1405 = vmatpush1.bf16.msra.mxu0 %v915
    %1406 = vmatprep.subr.bf16.mxu0 %v920
    %1407 = vmatpush1.bf16.msra.mxu0 %v919
    %1408 = vmatprep.subr.bf16.mxu0 %v924
    %1409 = vmatpush1.bf16.msra.mxu0 %v923
    %1410 = vmatprep.subr.bf16.mxu0 %v928
    %1411 = vmatpush1.bf16.msra.mxu0 %v927
    %1412 = vmatprep.subr.bf16.mxu0 %v932
    %1413 = vmatpush1.bf16.msra.mxu0 %v931
    %1414 = vmatprep.mubr.bf16.mxu0 %v282
    %1415 = vmatmul.mubr.bf16.gmra.mrb[0].mxu0 %v281
    %v1416 = vpop.f32.mrb[0].mxu0
    %v1417 = vadd.f32 %v254, %v1416
    %v1418 = vpop.f32.mrb[0].mxu0
    %v1419 = vadd.f32 %v258, %v1418
    %v1420 = vpop.f32.mrb[0].mxu0
    %v1421 = vadd.f32 %v254, %v1420
    %v1422 = vpop.f32.mrb[0].mxu0
    %v1423 = vadd.f32 %v258, %v1422
    %1424 = vdwg.mxu0
    %1425 = vmatprep.subr.bf16.mxu0 %v936
    %1426 = vmatpush1.bf16.msra.mxu0 %v935
    %1427 = vmatprep.subr.bf16.mxu0 %v940
    %1428 = vmatpush1.bf16.msra.mxu0 %v939
    %1429 = vmatprep.subr.bf16.mxu0 %v944
    %1430 = vmatpush1.bf16.msra.mxu0 %v943
    %1431 = vmatprep.subr.bf16.mxu0 %v948
    %1432 = vmatpush1.bf16.msra.mxu0 %v947
    %1433 = vmatprep.subr.bf16.mxu0 %v952
    %1434 = vmatpush1.bf16.msra.mxu0 %v951
    %1435 = vmatprep.subr.bf16.mxu0 %v956
    %1436 = vmatpush1.bf16.msra.mxu0 %v955
    %1437 = vmatprep.subr.bf16.mxu0 %v960
    %1438 = vmatpush1.bf16.msra.mxu0 %v959
    %1439 = vmatprep.subr.bf16.mxu0 %v964
    %1440 = vmatpush1.bf16.msra.mxu0 %v963
    %1441 = vmatprep.subr.bf16.mxu0 %v968
    %1442 = vmatpush1.bf16.msra.mxu0 %v967
    %1443 = vmatprep.subr.bf16.mxu0 %v972
    %1444 = vmatpush1.bf16.msra.mxu0 %v971
    %1445 = vmatprep.subr.bf16.mxu0 %v976
    %1446 = vmatpush1.bf16.msra.mxu0 %v975
    %1447 = vmatprep.subr.bf16.mxu0 %v980
    %1448 = vmatpush1.bf16.msra.mxu0 %v979
    %1449 = vmatprep.subr.bf16.mxu0 %v984
    %1450 = vmatpush1.bf16.msra.mxu0 %v983
    %1451 = vmatprep.subr.bf16.mxu0 %v988
    %1452 = vmatpush1.bf16.msra.mxu0 %v987
    %1453 = vmatprep.subr.bf16.mxu0 %v992
    %1454 = vmatpush1.bf16.msra.mxu0 %v991
    %1455 = vmatprep.subr.bf16.mxu0 %v996
    %1456 = vmatpush1.bf16.msra.mxu0 %v995
    %1457 = vmatprep.mubr.bf16.mxu0 %v284
    %1458 = vmatmul.mubr.bf16.gmra.mrb[0].mxu0 %v283
    %v1459 = vpop.f32.mrb[0].mxu0
    %v1460 = vadd.f32 %v1417, %v1459
    %v1461 = vpop.f32.mrb[0].mxu0
    %v1462 = vadd.f32 %v1419, %v1461
    %v1463 = vpop.f32.mrb[0].mxu0
    %v1464 = vadd.f32 %v1421, %v1463
    %v1465 = vpop.f32.mrb[0].mxu0
    %v1466 = vadd.f32 %v1423, %v1465
    %1467 = vdwg.mxu0
    %1468 = vmatprep.subr.bf16.mxu0 %v1000
    %1469 = vmatpush1.bf16.msra.mxu0 %v999
    %1470 = vmatprep.subr.bf16.mxu0 %v1004
    %1471 = vmatpush1.bf16.msra.mxu0 %v1003
    %1472 = vmatprep.subr.bf16.mxu0 %v1008
    %1473 = vmatpush1.bf16.msra.mxu0 %v1007
    %1474 = vmatprep.subr.bf16.mxu0 %v1012
    %1475 = vmatpush1.bf16.msra.mxu0 %v1011
    %1476 = vmatprep.subr.bf16.mxu0 %v1016
    %1477 = vmatpush1.bf16.msra.mxu0 %v1015
    %1478 = vmatprep.subr.bf16.mxu0 %v1020
    %1479 = vmatpush1.bf16.msra.mxu0 %v1019
    %1480 = vmatprep.subr.bf16.mxu0 %v1024
    %1481 = vmatpush1.bf16.msra.mxu0 %v1023
    %1482 = vmatprep.subr.bf16.mxu0 %v1028
    %1483 = vmatpush1.bf16.msra.mxu0 %v1027
    %1484 = vmatprep.subr.bf16.mxu0 %v1032
    %1485 = vmatpush1.bf16.msra.mxu0 %v1031
    %1486 = vmatprep.subr.bf16.mxu0 %v1036
    %1487 = vmatpush1.bf16.msra.mxu0 %v1035
    %1488 = vmatprep.subr.bf16.mxu0 %v1040
    %1489 = vmatpush1.bf16.msra.mxu0 %v1039
    %1490 = vmatprep.subr.bf16.mxu0 %v1044
    %1491 = vmatpush1.bf16.msra.mxu0 %v1043
    %1492 = vmatprep.subr.bf16.mxu0 %v1048
    %1493 = vmatpush1.bf16.msra.mxu0 %v1047
    %1494 = vmatprep.subr.bf16.mxu0 %v1052
    %1495 = vmatpush1.bf16.msra.mxu0 %v1051
    %1496 = vmatprep.subr.bf16.mxu0 %v1056
    %1497 = vmatpush1.bf16.msra.mxu0 %v1055
    %1498 = vmatprep.subr.bf16.mxu0 %v1060
    %1499 = vmatpush1.bf16.msra.mxu0 %v1059
    %1500 = vmatprep.mubr.bf16.mxu0 %v286
    %1501 = vmatmul.mubr.bf16.gmra.mrb[0].mxu0 %v285
    %v1502 = vpop.f32.mrb[0].mxu0
    %v1503 = vadd.f32 %v1460, %v1502
    %v1504 = vpop.f32.mrb[0].mxu0
    %v1505 = vadd.f32 %v1462, %v1504
    %v1506 = vpop.f32.mrb[0].mxu0
    %v1507 = vadd.f32 %v1464, %v1506
    %v1508 = vpop.f32.mrb[0].mxu0
    %v1509 = vadd.f32 %v1466, %v1508
    %1510 = vdwg.mxu0
    %v1511 = vtanh.pop %v1374
    %v1512 = vtanh.pop %v1376
    %v1513 = vtanh.pop %v1503
    %v1514 = vtanh.pop %v1505
    %v1515 = vtanh.pop %v1378
    %v1516 = vtanh.pop %v1380
    %v1517 = vtanh.pop %v1507
    %v1518 = vtanh.pop %v1509
    %v1519 = vld [vmem:[%s3] sm:$0xf]
    %v1521 = vlaneseq
    %v1522 = vshrl.u32 %v1521, 7
    %v1523 = vsub.s32 0, %v1522
    %v1524 = vrot.slane %v1519, %v1523
    %v1525 = vlaneseq
    %v1526 = vshrl.u32 %v1525, 7
    %v1527 = vsub.s32 1, %v1526
    %v1528 = vrot.slane %v1519, %v1527
    %v1529 = vlaneseq
    %v1530 = vshrl.u32 %v1529, 7
    %v1531 = vsub.s32 2, %v1530
    %v1532 = vrot.slane %v1519, %v1531
    %v1533 = vlaneseq
    %v1534 = vshrl.u32 %v1533, 7
    %v1535 = vsub.s32 3, %v1534
    %v1536 = vrot.slane %v1519, %v1535
    %v1541 = vmul.f32 %v1511, %v1524
    %v1542 = vmul.f32 %v1512, %v1528
    %v1543 = vmul.f32 %v1513, %v1532
    %v1544 = vmul.f32 %v1514, %v1536
    %v1545 = vmul.f32 %v1515, %v1524
    %v1546 = vmul.f32 %v1516, %v1528
    %v1547 = vmul.f32 %v1517, %v1532
    %v1548 = vmul.f32 %v1518, %v1536
    %v1549 = vadd.f32 %v1541, %v1542
    %v1550 = vadd.f32 %v1549, %v1543
    %v1551 = vadd.f32 %v1550, %v1544
    %1552 = vadd.xlane.f32.xlu0 %v1551
    %v1553 = vpop.xlane.xlu0 %1552
    %v1554 = vadd.f32 %v1545, %v1546
    %v1555 = vadd.f32 %v1554, %v1547
    %v1556 = vadd.f32 %v1555, %v1548
    %1557 = vadd.xlane.f32.xlu0 %v1556
    %v1558 = vpop.xlane.xlu0 %1557
    %v1559 = vld [vmem:[#allocation2] sm:$0x1]
    %v1561 = vlaneseq
    %v1562 = vshrl.u32 %v1561, 7
    %v1563 = vsub.s32 0, %v1562
    %v1564 = vrot.slane %v1559, %v1563
    %1565 = vset.pattern.permute.xlu0 0
    %1566 = vperm.xlu0 %1565, %v1564
    %v1567 = vpop.permute.xlu0 %1566
    %v1569 = vadd.f32 %v1553, %v1567
    %v1570 = vadd.f32 %v1558, %v1567
    %v1573 = vlaneseq
    %v1574 = vand.u32 %v1573, 127
    %v1575 = vlaneseq
    %v1576 = vshrl.u32 %v1575, 7
    %v1577 = vsub.s32 %v1574, %v1576
    %v1578 = vrot.slane %v1569, %v1577
    %v1579 = vlaneseq
    %v1580 = vshrl.u32 %v1579, 7
    %v1581 = vsub.s32 %v1574, %v1580
    %v1582 = vrot.slane %v1570, %v1581
    %vm1583 = vcmask 1041409
    %v1584 = vsel %vm1583, %v1582, %v1578
    %vm1586 = vcmask 58368
    %v1587 = vsel %vm1586, %v1584, -inf
    %1588 = vmax.xlane.f32.xlu0 %v1587
    %v1589 = vpop.xlane.xlu0 %1588
    %v1591 = vlaneseq
    %v1592 = vshrl.u32 %v1591, 7
    %v1593 = vsub.s32 0, %v1592
    %v1594 = vrot.slane %v1589, %v1593
    %v1595 = vlaneseq
    %v1596 = vshrl.u32 %v1595, 7
    %v1597 = vsub.s32 1, %v1596
    %v1598 = vrot.slane %v1589, %v1597
    %v1601 = vsub.f32 %v1569, %v1594
    %v1602 = vsub.f32 %v1570, %v1598
    %v1603 = vmul.f32 %v1601, 1.442695
    %v1604 = vpow.pop %v1603
    %v1605 = vmul.f32 %v1602, 1.442695
    %v1606 = vpow.pop %v1605
    %1609 = vset.pattern.permute.xlu0 0
    %1610 = vperm.xlu0 %1609, %v1604
    %v1611 = vpop.permute.xlu0 %1610
    %1612 = vset.pattern.permute.xlu0 0
    %1613 = vperm.xlu0 %1612, %v1606
    %v1614 = vpop.permute.xlu0 %1613
    %v1615 = vlaneseq
    %v1616 = vshrl.u32 %v1615, 7
    %v1617 = vsub.s32 %v1574, %v1616
    %v1618 = vrot.slane %v1611, %v1617
    %v1619 = vlaneseq
    %v1620 = vshrl.u32 %v1619, 7
    %v1621 = vsub.s32 %v1574, %v1620
    %v1622 = vrot.slane %v1614, %v1621
    %v1623 = vsel %vm1583, %v1622, %v1618
    %v1625 = vsel %vm1586, %v1623, 0.0
    %1626 = vadd.xlane.f32.xlu0 %v1625
    %v1627 = vpop.xlane.xlu0 %1626
    %v1628 = vrcp.pop %v1627
    %v1630 = vlaneseq
    %v1631 = vshrl.u32 %v1630, 7
    %v1632 = vsub.s32 0, %v1631
    %v1633 = vrot.slane %v1628, %v1632
    %v1634 = vlaneseq
    %v1635 = vshrl.u32 %v1634, 7
    %v1636 = vsub.s32 1, %v1635
    %v1637 = vrot.slane %v1628, %v1636
    %v1640 = vmul.f32 %v1604, %v1633
    %v1641 = vmul.f32 %v1606, %v1637
    %v1642 = vunpack.c.l.bf16 %v43
    %v1643 = vunpack.c.h.bf16 %v43
    %v1644 = vunpack.c.l.bf16 %v44
    %v1645 = vunpack.c.h.bf16 %v44
    %v1646 = vunpack.c.l.bf16 %v45
    %v1647 = vunpack.c.h.bf16 %v45
    %v1648 = vunpack.c.l.bf16 %v46
    %v1649 = vunpack.c.h.bf16 %v46
    %v1650 = vunpack.c.l.bf16 %v47
    %v1651 = vunpack.c.h.bf16 %v47
    %v1652 = vunpack.c.l.bf16 %v48
    %v1653 = vunpack.c.h.bf16 %v48
    %1655 = vset.pattern.permute.xlu0 0
    %1656 = vperm.xlu0 %1655, %v1640
    %v1657 = vpop.permute.xlu0 %1656
    %1660 = vset.pattern.permute.xlu0 0
    %1661 = vperm.xlu0 %1660, %v1641
    %v1662 = vpop.permute.xlu0 %1661
    %v1664 = vmul.f32 %v1642, %v1657
    %v1665 = vmul.f32 %v1643, %v1657
    %v1666 = vmul.f32 %v1644, %v1657
    %v1667 = vmul.f32 %v1645, %v1657
    %v1668 = vmul.f32 %v1646, %v1657
    %v1669 = vmul.f32 %v1647, %v1657
    %v1670 = vmul.f32 %v1648, %v1662
    %v1671 = vmul.f32 %v1649, %v1662
    %v1672 = vmul.f32 %v1650, %v1662
    %v1673 = vmul.f32 %v1651, %v1662
    %v1674 = vmul.f32 %v1652, %v1662
    %v1675 = vmul.f32 %v1653, %v1662
    %v1676 = vrot.slane %v1664, 4
    %v1677 = vadd.f32 %v1664, %v1676
    %v1678 = vrot.slane %v1677, 2
    %v1679 = vadd.f32 %v1677, %v1678
    %v1680 = vrot.slane %v1679, 1
    %v1681 = vadd.f32 %v1679, %v1680
    %v1682 = vrot.slane %v1665, 4
    %v1683 = vadd.f32 %v1665, %v1682
    %v1684 = vrot.slane %v1683, 2
    %v1685 = vadd.f32 %v1683, %v1684
    %v1686 = vrot.slane %v1685, 1
    %v1687 = vadd.f32 %v1685, %v1686
    %v1688 = vrot.slane %v1666, 4
    %v1689 = vadd.f32 %v1666, %v1688
    %v1690 = vrot.slane %v1689, 2
    %v1691 = vadd.f32 %v1689, %v1690
    %v1692 = vrot.slane %v1691, 1
    %v1693 = vadd.f32 %v1691, %v1692
    %v1694 = vrot.slane %v1667, 4
    %v1695 = vadd.f32 %v1667, %v1694
    %v1696 = vrot.slane %v1695, 2
    %v1697 = vadd.f32 %v1695, %v1696
    %v1698 = vrot.slane %v1697, 1
    %v1699 = vadd.f32 %v1697, %v1698
    %v1700 = vrot.slane %v1668, 4
    %v1701 = vadd.f32 %v1668, %v1700
    %v1702 = vrot.slane %v1701, 2
    %v1703 = vadd.f32 %v1701, %v1702
    %v1704 = vrot.slane %v1703, 1
    %v1705 = vadd.f32 %v1703, %v1704
    %v1706 = vrot.slane %v1669, 4
    %v1707 = vadd.f32 %v1669, %v1706
    %v1708 = vrot.slane %v1707, 2
    %v1709 = vadd.f32 %v1707, %v1708
    %v1710 = vrot.slane %v1709, 1
    %v1711 = vadd.f32 %v1709, %v1710
    %v1712 = vrot.slane %v1670, 4
    %v1713 = vadd.f32 %v1670, %v1712
    %v1714 = vrot.slane %v1713, 2
    %v1715 = vadd.f32 %v1713, %v1714
    %v1716 = vrot.slane %v1715, 1
    %v1717 = vadd.f32 %v1715, %v1716
    %v1718 = vrot.slane %v1671, 4
    %v1719 = vadd.f32 %v1671, %v1718
    %v1720 = vrot.slane %v1719, 2
    %v1721 = vadd.f32 %v1719, %v1720
    %v1722 = vrot.slane %v1721, 1
    %v1723 = vadd.f32 %v1721, %v1722
    %v1724 = vrot.slane %v1672, 4
    %v1725 = vadd.f32 %v1672, %v1724
    %v1726 = vrot.slane %v1725, 2
    %v1727 = vadd.f32 %v1725, %v1726
    %v1728 = vrot.slane %v1727, 1
    %v1729 = vadd.f32 %v1727, %v1728
    %v1730 = vrot.slane %v1673, 4
    %v1731 = vadd.f32 %v1673, %v1730
    %v1732 = vrot.slane %v1731, 2
    %v1733 = vadd.f32 %v1731, %v1732
    %v1734 = vrot.slane %v1733, 1
    %v1735 = vadd.f32 %v1733, %v1734
    %v1736 = vrot.slane %v1674, 4
    %v1737 = vadd.f32 %v1674, %v1736
    %v1738 = vrot.slane %v1737, 2
    %v1739 = vadd.f32 %v1737, %v1738
    %v1740 = vrot.slane %v1739, 1
    %v1741 = vadd.f32 %v1739, %v1740
    %v1742 = vrot.slane %v1675, 4
    %v1743 = vadd.f32 %v1675, %v1742
    %v1744 = vrot.slane %v1743, 2
    %v1745 = vadd.f32 %v1743, %v1744
    %v1746 = vrot.slane %v1745, 1
    %v1747 = vadd.f32 %v1745, %v1746
    %v1748 = vld [vmem:[%s5] sm:$0xff]
    %v1749 = vld [vmem:[%s5 + $0x8] sm:$0xff]
    %v1750 = vld [vmem:[%s5 + $0x10] sm:$0xff]
    %v1751 = vld [vmem:[%s5 + $0x18] sm:$0xff]
    %v1752 = vld [vmem:[%s5 + $0x20] sm:$0xff]
    %v1753 = vld [vmem:[%s5 + $0x28] sm:$0xff]
    %v1754 = vld [vmem:[%s5 + $0x30] sm:$0xff]
    %v1755 = vld [vmem:[%s5 + $0x38] sm:$0xff]
    %v1756 = vld [vmem:[%s5 + $0x40] sm:$0xff]
    %v1757 = vld [vmem:[%s5 + $0x48] sm:$0xff]
    %v1758 = vld [vmem:[%s5 + $0x50] sm:$0xff]
    %v1759 = vld [vmem:[%s5 + $0x58] sm:$0xff]
    %v1760 = vld [vmem:[%s5 + $0x60] sm:$0xff]
    %v1761 = vld [vmem:[%s5 + $0x68] sm:$0xff]
    %v1762 = vld [vmem:[%s5 + $0x70] sm:$0xff]
    %v1763 = vld [vmem:[%s5 + $0x78] sm:$0xff]
    %v1764 = vld [vmem:[%s5 + $0x80] sm:$0xff]
    %v1765 = vld [vmem:[%s5 + $0x88] sm:$0xff]
    %v1766 = vld [vmem:[%s5 + $0x90] sm:$0xff]
    %v1767 = vld [vmem:[%s5 + $0x98] sm:$0xff]
    %v1768 = vld [vmem:[%s5 + $0xa0] sm:$0xff]
    %v1769 = vld [vmem:[%s5 + $0xa8] sm:$0xff]
    %v1770 = vld [vmem:[%s5 + $0xb0] sm:$0xff]
    %v1771 = vld [vmem:[%s5 + $0xb8] sm:$0xff]
    %v1772 = vld [vmem:[%s5 + $0xc0] sm:$0xff]
    %v1773 = vld [vmem:[%s5 + $0xc8] sm:$0xff]
    %v1774 = vld [vmem:[%s5 + $0xd0] sm:$0xff]
    %v1775 = vld [vmem:[%s5 + $0xd8] sm:$0xff]
    %v1776 = vld [vmem:[%s5 + $0xe0] sm:$0xff]
    %v1777 = vld [vmem:[%s5 + $0xe8] sm:$0xff]
    %v1778 = vld [vmem:[%s5 + $0xf0] sm:$0xff]
    %v1779 = vld [vmem:[%s5 + $0xf8] sm:$0xff]
    %v1780 = vld [vmem:[%s5 + $0x100] sm:$0xff]
    %v1781 = vld [vmem:[%s5 + $0x108] sm:$0xff]
    %v1782 = vld [vmem:[%s5 + $0x110] sm:$0xff]
    %v1783 = vld [vmem:[%s5 + $0x118] sm:$0xff]
    %v1784 = vld [vmem:[%s5 + $0x120] sm:$0xff]
    %v1785 = vld [vmem:[%s5 + $0x128] sm:$0xff]
    %v1786 = vld [vmem:[%s5 + $0x130] sm:$0xff]
    %v1787 = vld [vmem:[%s5 + $0x138] sm:$0xff]
    %v1788 = vld [vmem:[%s5 + $0x140] sm:$0xff]
    %v1789 = vld [vmem:[%s5 + $0x148] sm:$0xff]
    %v1790 = vld [vmem:[%s5 + $0x150] sm:$0xff]
    %v1791 = vld [vmem:[%s5 + $0x158] sm:$0xff]
    %v1792 = vld [vmem:[%s5 + $0x160] sm:$0xff]
    %v1793 = vld [vmem:[%s5 + $0x168] sm:$0xff]
    %v1794 = vld [vmem:[%s5 + $0x170] sm:$0xff]
    %v1795 = vld [vmem:[%s5 + $0x178] sm:$0xff]
    %v1796 = vld [vmem:[%s5 + $0x180] sm:$0xff]
    %v1797 = vld [vmem:[%s5 + $0x188] sm:$0xff]
    %v1798 = vld [vmem:[%s5 + $0x190] sm:$0xff]
    %v1799 = vld [vmem:[%s5 + $0x198] sm:$0xff]
    %v1800 = vld [vmem:[%s5 + $0x1a0] sm:$0xff]
    %v1801 = vld [vmem:[%s5 + $0x1a8] sm:$0xff]
    %v1802 = vld [vmem:[%s5 + $0x1b0] sm:$0xff]
    %v1803 = vld [vmem:[%s5 + $0x1b8] sm:$0xff]
    %v1804 = vld [vmem:[%s5 + $0x1c0] sm:$0xff]
    %v1805 = vld [vmem:[%s5 + $0x1c8] sm:$0xff]
    %v1806 = vld [vmem:[%s5 + $0x1d0] sm:$0xff]
    %v1807 = vld [vmem:[%s5 + $0x1d8] sm:$0xff]
    %v1808 = vld [vmem:[%s5 + $0x1e0] sm:$0xff]
    %v1809 = vld [vmem:[%s5 + $0x1e8] sm:$0xff]
    %v1810 = vld [vmem:[%s5 + $0x1f0] sm:$0xff]
    %v1811 = vld [vmem:[%s5 + $0x1f8] sm:$0xff]
    %v1812 = vld [vmem:[%s5 + $0x200] sm:$0xff]
    %v1813 = vld [vmem:[%s5 + $0x208] sm:$0xff]
    %v1814 = vld [vmem:[%s5 + $0x210] sm:$0xff]
    %v1815 = vld [vmem:[%s5 + $0x218] sm:$0xff]
    %v1816 = vld [vmem:[%s5 + $0x220] sm:$0xff]
    %v1817 = vld [vmem:[%s5 + $0x228] sm:$0xff]
    %v1818 = vld [vmem:[%s5 + $0x230] sm:$0xff]
    %v1819 = vld [vmem:[%s5 + $0x238] sm:$0xff]
    %v1820 = vld [vmem:[%s5 + $0x240] sm:$0xff]
    %v1821 = vld [vmem:[%s5 + $0x248] sm:$0xff]
    %v1822 = vld [vmem:[%s5 + $0x250] sm:$0xff]
    %v1823 = vld [vmem:[%s5 + $0x258] sm:$0xff]
    %v1824 = vld [vmem:[%s5 + $0x260] sm:$0xff]
    %v1825 = vld [vmem:[%s5 + $0x268] sm:$0xff]
    %v1826 = vld [vmem:[%s5 + $0x270] sm:$0xff]
    %v1827 = vld [vmem:[%s5 + $0x278] sm:$0xff]
    %v1828 = vld [vmem:[%s5 + $0x280] sm:$0xff]
    %v1829 = vld [vmem:[%s5 + $0x288] sm:$0xff]
    %v1830 = vld [vmem:[%s5 + $0x290] sm:$0xff]
    %v1831 = vld [vmem:[%s5 + $0x298] sm:$0xff]
    %v1832 = vld [vmem:[%s5 + $0x2a0] sm:$0xff]
    %v1833 = vld [vmem:[%s5 + $0x2a8] sm:$0xff]
    %v1834 = vld [vmem:[%s5 + $0x2b0] sm:$0xff]
    %v1835 = vld [vmem:[%s5 + $0x2b8] sm:$0xff]
    %v1836 = vld [vmem:[%s5 + $0x2c0] sm:$0xff]
    %v1837 = vld [vmem:[%s5 + $0x2c8] sm:$0xff]
    %v1838 = vld [vmem:[%s5 + $0x2d0] sm:$0xff]
    %v1839 = vld [vmem:[%s5 + $0x2d8] sm:$0xff]
    %v1840 = vld [vmem:[%s5 + $0x2e0] sm:$0xff]
    %v1841 = vld [vmem:[%s5 + $0x2e8] sm:$0xff]
    %v1842 = vld [vmem:[%s5 + $0x2f0] sm:$0xff]
    %v1843 = vld [vmem:[%s5 + $0x2f8] sm:$0xff]
    %v1844 = vld [vmem:[%s6] sm:$0x1]
    %v1846 = vlaneseq
    %v1847 = vshrl.u32 %v1846, 7
    %v1848 = vsub.s32 0, %v1847
    %v1849 = vrot.slane %v1844, %v1848
    %v1863 = vsel %vm1583, %v1717, %v1681
    %v1864 = vsel %vm1583, %v1723, %v1687
    %v1865 = vsel %vm1583, %v1729, %v1693
    %v1866 = vsel %vm1583, %v1735, %v1699
    %v1867 = vsel %vm1583, %v1741, %v1705
    %v1868 = vsel %vm1583, %v1747, %v1711
    %1875 = vmatprep.subr.mxu0 0.0
    %1876 = vmatpush1.msra.mxu0 %v1748
    %1877 = vmatprep.subr.mxu0 0.0
    %1878 = vmatpush1.msra.mxu0 %v1749
    %1879 = vmatprep.subr.mxu0 0.0
    %1880 = vmatpush1.msra.mxu0 %v1750
    %1881 = vmatprep.subr.mxu0 0.0
    %1882 = vmatpush1.msra.mxu0 %v1751
    %1883 = vmatprep.subr.mxu0 0.0
    %1884 = vmatpush1.msra.mxu0 %v1752
    %1885 = vmatprep.subr.mxu0 0.0
    %1886 = vmatpush1.msra.mxu0 %v1753
    %1887 = vmatprep.subr.mxu0 0.0
    %1888 = vmatpush1.msra.mxu0 %v1754
    %1889 = vmatprep.subr.mxu0 0.0
    %1890 = vmatpush1.msra.mxu0 %v1755
    %1891 = vmatprep.subr.mxu0 0.0
    %1892 = vmatpush1.msra.mxu0 %v1756
    %1893 = vmatprep.subr.mxu0 0.0
    %1894 = vmatpush1.msra.mxu0 %v1757
    %1895 = vmatprep.subr.mxu0 0.0
    %1896 = vmatpush1.msra.mxu0 %v1758
    %1897 = vmatprep.subr.mxu0 0.0
    %1898 = vmatpush1.msra.mxu0 %v1759
    %1899 = vmatprep.subr.mxu0 0.0
    %1900 = vmatpush1.msra.mxu0 %v1760
    %1901 = vmatprep.subr.mxu0 0.0
    %1902 = vmatpush1.msra.mxu0 %v1761
    %1903 = vmatprep.subr.mxu0 0.0
    %1904 = vmatpush1.msra.mxu0 %v1762
    %1905 = vmatprep.subr.mxu0 0.0
    %1906 = vmatpush1.msra.mxu0 %v1763
    %1907 = vmatprep.subr.mxu0 0.0
    %1908 = vmatpush1.msra.mxu0 %v1764
    %1909 = vmatprep.subr.mxu0 0.0
    %1910 = vmatpush1.msra.mxu0 %v1765
    %1911 = vmatprep.subr.mxu0 0.0
    %1912 = vmatpush1.msra.mxu0 %v1766
    %1913 = vmatprep.subr.mxu0 0.0
    %1914 = vmatpush1.msra.mxu0 %v1767
    %1915 = vmatprep.subr.mxu0 0.0
    %1916 = vmatpush1.msra.mxu0 %v1768
    %1917 = vmatprep.subr.mxu0 0.0
    %1918 = vmatpush1.msra.mxu0 %v1769
    %1919 = vmatprep.subr.mxu0 0.0
    %1920 = vmatpush1.msra.mxu0 %v1770
    %1921 = vmatprep.subr.mxu0 0.0
    %1922 = vmatpush1.msra.mxu0 %v1771
    %1923 = vmatprep.subr.mxu0 0.0
    %1924 = vmatpush1.msra.mxu0 %v1772
    %1925 = vmatprep.subr.mxu0 0.0
    %1926 = vmatpush1.msra.mxu0 %v1773
    %1927 = vmatprep.subr.mxu0 0.0
    %1928 = vmatpush1.msra.mxu0 %v1774
    %1929 = vmatprep.subr.mxu0 0.0
    %1930 = vmatpush1.msra.mxu0 %v1775
    %1931 = vmatprep.subr.mxu0 0.0
    %1932 = vmatpush1.msra.mxu0 %v1776
    %1933 = vmatprep.subr.mxu0 0.0
    %1934 = vmatpush1.msra.mxu0 %v1777
    %1935 = vmatprep.subr.mxu0 0.0
    %1936 = vmatpush1.msra.mxu0 %v1778
    %1937 = vmatprep.subr.mxu0 0.0
    %1938 = vmatpush1.msra.mxu0 %v1779
    %1939 = vmatprep.mubr.f32.mxu0 %v1864
    %1940 = vmatmul.mubr.f32.gmra.mrb[0].mxu0 %v1863
    %v1941 = vpop.f32.mrb[0].mxu0
    %v1942 = vadd.f32 %v1849, %v1941
    %v1943 = vpop.f32.mrb[0].mxu0
    %1944 = vdwg.mxu0
    %1945 = vmatprep.subr.mxu0 0.0
    %1946 = vmatpush1.msra.mxu0 %v1780
    %1947 = vmatprep.subr.mxu0 0.0
    %1948 = vmatpush1.msra.mxu0 %v1781
    %1949 = vmatprep.subr.mxu0 0.0
    %1950 = vmatpush1.msra.mxu0 %v1782
    %1951 = vmatprep.subr.mxu0 0.0
    %1952 = vmatpush1.msra.mxu0 %v1783
    %1953 = vmatprep.subr.mxu0 0.0
    %1954 = vmatpush1.msra.mxu0 %v1784
    %1955 = vmatprep.subr.mxu0 0.0
    %1956 = vmatpush1.msra.mxu0 %v1785
    %1957 = vmatprep.subr.mxu0 0.0
    %1958 = vmatpush1.msra.mxu0 %v1786
    %1959 = vmatprep.subr.mxu0 0.0
    %1960 = vmatpush1.msra.mxu0 %v1787
    %1961 = vmatprep.subr.mxu0 0.0
    %1962 = vmatpush1.msra.mxu0 %v1788
    %1963 = vmatprep.subr.mxu0 0.0
    %1964 = vmatpush1.msra.mxu0 %v1789
    %1965 = vmatprep.subr.mxu0 0.0
    %1966 = vmatpush1.msra.mxu0 %v1790
    %1967 = vmatprep.subr.mxu0 0.0
    %1968 = vmatpush1.msra.mxu0 %v1791
    %1969 = vmatprep.subr.mxu0 0.0
    %1970 = vmatpush1.msra.mxu0 %v1792
    %1971 = vmatprep.subr.mxu0 0.0
    %1972 = vmatpush1.msra.mxu0 %v1793
    %1973 = vmatprep.subr.mxu0 0.0
    %1974 = vmatpush1.msra.mxu0 %v1794
    %1975 = vmatprep.subr.mxu0 0.0
    %1976 = vmatpush1.msra.mxu0 %v1795
    %1977 = vmatprep.subr.mxu0 0.0
    %1978 = vmatpush1.msra.mxu0 %v1796
    %1979 = vmatprep.subr.mxu0 0.0
    %1980 = vmatpush1.msra.mxu0 %v1797
    %1981 = vmatprep.subr.mxu0 0.0
    %1982 = vmatpush1.msra.mxu0 %v1798
    %1983 = vmatprep.subr.mxu0 0.0
    %1984 = vmatpush1.msra.mxu0 %v1799
    %1985 = vmatprep.subr.mxu0 0.0
    %1986 = vmatpush1.msra.mxu0 %v1800
    %1987 = vmatprep.subr.mxu0 0.0
    %1988 = vmatpush1.msra.mxu0 %v1801
    %1989 = vmatprep.subr.mxu0 0.0
    %1990 = vmatpush1.msra.mxu0 %v1802
    %1991 = vmatprep.subr.mxu0 0.0
    %1992 = vmatpush1.msra.mxu0 %v1803
    %1993 = vmatprep.subr.mxu0 0.0
    %1994 = vmatpush1.msra.mxu0 %v1804
    %1995 = vmatprep.subr.mxu0 0.0
    %1996 = vmatpush1.msra.mxu0 %v1805
    %1997 = vmatprep.subr.mxu0 0.0
    %1998 = vmatpush1.msra.mxu0 %v1806
    %1999 = vmatprep.subr.mxu0 0.0
    %2000 = vmatpush1.msra.mxu0 %v1807
    %2001 = vmatprep.subr.mxu0 0.0
    %2002 = vmatpush1.msra.mxu0 %v1808
    %2003 = vmatprep.subr.mxu0 0.0
    %2004 = vmatpush1.msra.mxu0 %v1809
    %2005 = vmatprep.subr.mxu0 0.0
    %2006 = vmatpush1.msra.mxu0 %v1810
    %2007 = vmatprep.subr.mxu0 0.0
    %2008 = vmatpush1.msra.mxu0 %v1811
    %2009 = vmatprep.mubr.f32.mxu0 %v1866
    %2010 = vmatmul.mubr.f32.gmra.mrb[0].mxu0 %v1865
    %v2011 = vpop.f32.mrb[0].mxu0
    %v2012 = vadd.f32 %v1942, %v2011
    %v2013 = vpop.f32.mrb[0].mxu0
    %2014 = vdwg.mxu0
    %2015 = vmatprep.subr.mxu0 0.0
    %2016 = vmatpush1.msra.mxu0 %v1812
    %2017 = vmatprep.subr.mxu0 0.0
    %2018 = vmatpush1.msra.mxu0 %v1813
    %2019 = vmatprep.subr.mxu0 0.0
    %2020 = vmatpush1.msra.mxu0 %v1814
    %2021 = vmatprep.subr.mxu0 0.0
    %2022 = vmatpush1.msra.mxu0 %v1815
    %2023 = vmatprep.subr.mxu0 0.0
    %2024 = vmatpush1.msra.mxu0 %v1816
    %2025 = vmatprep.subr.mxu0 0.0
    %2026 = vmatpush1.msra.mxu0 %v1817
    %2027 = vmatprep.subr.mxu0 0.0
    %2028 = vmatpush1.msra.mxu0 %v1818
    %2029 = vmatprep.subr.mxu0 0.0
    %2030 = vmatpush1.msra.mxu0 %v1819
    %2031 = vmatprep.subr.mxu0 0.0
    %2032 = vmatpush1.msra.mxu0 %v1820
    %2033 = vmatprep.subr.mxu0 0.0
    %2034 = vmatpush1.msra.mxu0 %v1821
    %2035 = vmatprep.subr.mxu0 0.0
    %2036 = vmatpush1.msra.mxu0 %v1822
    %2037 = vmatprep.subr.mxu0 0.0
    %2038 = vmatpush1.msra.mxu0 %v1823
    %2039 = vmatprep.subr.mxu0 0.0
    %2040 = vmatpush1.msra.mxu0 %v1824
    %2041 = vmatprep.subr.mxu0 0.0
    %2042 = vmatpush1.msra.mxu0 %v1825
    %2043 = vmatprep.subr.mxu0 0.0
    %2044 = vmatpush1.msra.mxu0 %v1826
    %2045 = vmatprep.subr.mxu0 0.0
    %2046 = vmatpush1.msra.mxu0 %v1827
    %2047 = vmatprep.subr.mxu0 0.0
    %2048 = vmatpush1.msra.mxu0 %v1828
    %2049 = vmatprep.subr.mxu0 0.0
    %2050 = vmatpush1.msra.mxu0 %v1829
    %2051 = vmatprep.subr.mxu0 0.0
    %2052 = vmatpush1.msra.mxu0 %v1830
    %2053 = vmatprep.subr.mxu0 0.0
    %2054 = vmatpush1.msra.mxu0 %v1831
    %2055 = vmatprep.subr.mxu0 0.0
    %2056 = vmatpush1.msra.mxu0 %v1832
    %2057 = vmatprep.subr.mxu0 0.0
    %2058 = vmatpush1.msra.mxu0 %v1833
    %2059 = vmatprep.subr.mxu0 0.0
    %2060 = vmatpush1.msra.mxu0 %v1834
    %2061 = vmatprep.subr.mxu0 0.0
    %2062 = vmatpush1.msra.mxu0 %v1835
    %2063 = vmatprep.subr.mxu0 0.0
    %2064 = vmatpush1.msra.mxu0 %v1836
    %2065 = vmatprep.subr.mxu0 0.0
    %2066 = vmatpush1.msra.mxu0 %v1837
    %2067 = vmatprep.subr.mxu0 0.0
    %2068 = vmatpush1.msra.mxu0 %v1838
    %2069 = vmatprep.subr.mxu0 0.0
    %2070 = vmatpush1.msra.mxu0 %v1839
    %2071 = vmatprep.subr.mxu0 0.0
    %2072 = vmatpush1.msra.mxu0 %v1840
    %2073 = vmatprep.subr.mxu0 0.0
    %2074 = vmatpush1.msra.mxu0 %v1841
    %2075 = vmatprep.subr.mxu0 0.0
    %2076 = vmatpush1.msra.mxu0 %v1842
    %2077 = vmatprep.subr.mxu0 0.0
    %2078 = vmatpush1.msra.mxu0 %v1843
    %2079 = vmatprep.mubr.f32.mxu0 %v1868
    %2080 = vmatmul.mubr.f32.gmra.mrb[0].mxu0 %v1867
    %v2081 = vpop.f32.mrb[0].mxu0
    %v2082 = vadd.f32 %v2012, %v2081
    %v2083 = vpop.f32.mrb[0].mxu0
    %2084 = vdwg.mxu0
    %vm2085 = vcmask 9216
    %2086 = vst.msk [vmem:[#allocation6] sm:$0x3] %vm2085, %v2082
    // Predicated region
    $region34: #{tpu_custom_call.1} parent=1 // pred_check
      _
    $region35: #{tpu_custom_call.1} parent=1 // pred_check_branch
      %2088 = sbr.rel (0) target = $region37
    $region36: #{tpu_custom_call.1} parent=1 // pred_region
      %s2090 = ssub.s32 32, 32
      %2091 = vsyncadd [#allocation5], %s2090
      %s2093 = sshll.u32 [#allocation6], 4
      %s2094 = int_to_ptr.vmem [resolvable:$true] %s2093
      %2096 = dma.vmem_to_hbm [thread:$0]  %s2094, 32, %s7, [#allocation5]
    $region37: #{tpu_custom_call.1} parent=1 // pred_fallthru
      _
    // Predicated region
    $region38: #{tpu_custom_call.1} parent=1 // pred_check
      _
    $region39: #{tpu_custom_call.1} parent=1 // pred_check_branch
      %2098 = sbr.rel (0) target = $region41
    $region40: #{tpu_custom_call.1} parent=1 // pred_region
      %2099 = dma.done [#allocation5], 32
    $region41: #{tpu_custom_call.1} parent=1 // pred_fallthru
      _
    %2100 = vsyncpa [#allocation4], 1
    %2101 = vsyncpa [#allocation5], 1

</llo_original>
